<compile_context>
chip_gen: v7x
topology: tpu7x:2x2x1
jax: 0.10.0
libtpu: 0.0.40
codegen_flags: <defaults>
</compile_context>

<pallas_src>
import jax
import jax.numpy as jnp
from jax.experimental import pallas as pl
from jax.experimental.pallas import tpu as pltpu


def mlp_kernel(x_ref, w1_ref, b1_ref, w2_ref, b2_ref, w3_ref, b3_ref,
               w4_ref, b4_ref, o_ref):
    # Matmuls run on the MXU in the streaming dtype (bf16) with f32 accumulation;
    # bias-add + ReLU epilogue stays in f32 on the VPU.  Biases are read once per
    # grid step (no repeated broadcast materialization inside the body).
    h = jnp.dot(x_ref[...], w1_ref[...], preferred_element_type=jnp.float32)
    h = jnp.maximum(h + b1_ref[...], 0.0)
    h = jnp.dot(h.astype(w2_ref.dtype), w2_ref[...],
                preferred_element_type=jnp.float32)
    h = jnp.maximum(h + b2_ref[...], 0.0)
    h = jnp.dot(h.astype(w3_ref.dtype), w3_ref[...],
                preferred_element_type=jnp.float32)
    h = jnp.maximum(h + b3_ref[...], 0.0)
    h = jnp.dot(h.astype(w4_ref.dtype), w4_ref[...],
                preferred_element_type=jnp.float32)
    o_ref[...] = (h + b4_ref[...]).astype(o_ref.dtype)   # final Linear (no act)


def _choose_block_b(B):
    """Batch tile: 512-2048 for large B (85%+ HBM roofline territory),
    otherwise split into ~4 even tiles (keeps grid length >= 4 / even so both
    v7x TensorCores stay busy)."""
    if B >= 4 * 1024:
        return 1024
    if B >= 4 * 512:
        return 512
    blk = -(-B // 4)                 # ~4 tiles
    blk = max(8, -(-blk // 8) * 8)   # sublane multiple of 8
    return blk


def _x_map(i):
    return (i, 0)


def _fixed_map(i):
    return (0, 0)


def mlp_forward(x, params, *, block_b=None, use_bf16=True):
    """x: [B, input_dim]. params: list of 4 (W [in,out], b [1,out]) pairs."""
    assert len(params) == 4, "MLPNetwork has exactly 4 Linear layers"
    B, in_dim = x.shape
    out_dim = params[-1][0].shape[1]

    if block_b is None:
        block_b = _choose_block_b(B)
    block_b = max(8, (block_b // 8) * 8)

    Bp = pl.cdiv(B, block_b) * block_b          # pad batch to a whole grid
    grid = (Bp // block_b,)
    pad_out = max(128, pl.cdiv(out_dim, 128) * 128)   # lane-dense output slab

    compute_dtype = jnp.bfloat16 if use_bf16 else x.dtype

    xp = x if Bp == B else jnp.pad(x, ((0, Bp - B), (0, 0)))
    xp = xp.astype(compute_dtype)

    # Zero-pad the final layer's output dim -> unmasked, lane-dense stores.
    w4, b4 = params[-1]
    w4p = jnp.pad(w4, ((0, 0), (0, pad_out - out_dim)))
    b4p = jnp.pad(b4, ((0, 0), (0, pad_out - out_dim)))
    padded_params = list(params[:-1]) + [(w4p, b4p)]

    flat = []
    for (w, b) in padded_params:
        flat.append(w.astype(compute_dtype))      # bf16 weights -> MXU native
        flat.append(b.astype(jnp.float32))        # f32 bias for f32 epilogue

    # ---- cost estimate (advisory, helps XLA overlap this mem-bound kernel) ----
    flops = 2 * B * sum(int(w.shape[0]) * int(w.shape[1]) for w, _ in params)
    bytes_accessed = (xp.size * xp.dtype.itemsize
                      + Bp * pad_out * 4
                      + sum(a.size * a.dtype.itemsize for a in flat))
    cost = pl.CostEstimate(flops=int(flops), transcendentals=0,
                           bytes_accessed=int(bytes_accessed))

    # ---- VMEM budget: double-buffered x/out tiles + params + f32 activations ----
    max_width = max(pad_out, max(int(w.shape[1]) for w, _ in params), 128)
    vmem_est = (2 * block_b * in_dim * xp.dtype.itemsize          # x (2 bufs)
                + 2 * block_b * pad_out * 4                       # out (2 bufs)
                + 2 * sum(a.size * a.dtype.itemsize for a in flat)  # params
                + 4 * block_b * max_width * 4)                    # f32 intermediates
    vmem_limit = int(min(64 << 20, max(16 << 20, 2 * vmem_est)))

    def build_in_specs(single_buffer_consts):
        def const_spec(shape):
            if single_buffer_consts:
                # Weights/biases are grid-invariant: single-buffer them to free
                # VMEM headroom (matters most on v7x's 64 MiB) and drop useless
                # prologue DMA descriptors.
                return pl.BlockSpec(shape, _fixed_map,
                                    pipeline_mode=pl.Buffered(1))
            return pl.BlockSpec(shape, _fixed_map)

        specs = [pl.BlockSpec((block_b, in_dim), _x_map)]
        for (w, b) in padded_params:
            specs.append(const_spec(w.shape))
            specs.append(const_spec(b.shape))
        return specs

    def call(single_buffer_consts):
        return pl.pallas_call(
            mlp_kernel,
            out_shape=jax.ShapeDtypeStruct((Bp, pad_out), x.dtype),
            grid_spec=pltpu.PrefetchScalarGridSpec(
                num_scalar_prefetch=0,
                grid=grid,
                in_specs=build_in_specs(single_buffer_consts),
                out_specs=pl.BlockSpec((block_b, pad_out), _x_map),
            ),
            compiler_params=pltpu.CompilerParams(
                dimension_semantics=("parallel",),
                vmem_limit_bytes=vmem_limit,
            ),
            cost_estimate=cost,
        )(xp, *flat)

    try:
        out = call(single_buffer_consts=True)
    except Exception:
        # Fallback if this Pallas build rejects pipeline_mode=Buffered(1).
        out = call(single_buffer_consts=False)

    return out[:B, :out_dim]


def mlp_reference(x, params, *, use_bf16=True):
    """Pure-JAX reference mirroring the kernel's numerics (bf16 dots, f32 acc)."""
    cdt = jnp.bfloat16 if use_bf16 else jnp.float32
    h = x.astype(cdt)
    n = len(params)
    for i, (w, b) in enumerate(params):
        h = jnp.dot(h, w.astype(cdt),
                    preferred_element_type=jnp.float32) + b.astype(jnp.float32)
        if i < n - 1:
            h = jnp.maximum(h, 0.0).astype(cdt)
    return h.astype(x.dtype)


def init_linear(key, in_dim, out_dim):
    # PyTorch nn.Linear default init: U(-1/sqrt(fan_in), 1/sqrt(fan_in)).
    kw, kb = jax.random.split(key)
    bound = 1.0 / jnp.sqrt(jnp.float32(in_dim))
    w = jax.random.uniform(kw, (in_dim, out_dim), jnp.float32, -bound, bound)
    b = jax.random.uniform(kb, (1, out_dim), jnp.float32, -bound, bound)
    return w, b


if __name__ == "__main__":
    # Small, module-consistent shapes (MLPNetwork: 4 Linear layers, ReLU between).
    batch = 64
    input_dim = 16
    hidden_size = 32
    output_dim = 8

    key = jax.random.PRNGKey(0)
    kx, k1, k2, k3, k4 = jax.random.split(key, 5)

    x = jax.random.normal(kx, (batch, input_dim), jnp.float32)
    params = [
        init_linear(k1, input_dim, hidden_size),
        init_linear(k2, hidden_size, hidden_size),
        init_linear(k3, hidden_size, hidden_size),
        init_linear(k4, hidden_size, output_dim),
    ]

    out = mlp_forward(x, params)
    out = jax.block_until_ready(out)

    ref = mlp_reference(x, params)
    assert out.shape == (batch, output_dim)
    assert jnp.allclose(out, ref, atol=1e-2, rtol=1e-2)

    print("KERNEL_OK")
</pallas_src>

<mosaic_0001>
module attributes {stable_mosaic.version = 11 : i64} {
  func.func @mlp_kernel(%arg0: i32, %arg1: memref<16x16xbf16, #tpu.memory_space<vmem>>, %arg2: memref<16x32xbf16, #tpu.memory_space<vmem>>, %arg3: memref<1x32xf32, #tpu.memory_space<vmem>>, %arg4: memref<32x32xbf16, #tpu.memory_space<vmem>>, %arg5: memref<1x32xf32, #tpu.memory_space<vmem>>, %arg6: memref<32x32xbf16, #tpu.memory_space<vmem>>, %arg7: memref<1x32xf32, #tpu.memory_space<vmem>>, %arg8: memref<32x128xbf16, #tpu.memory_space<vmem>>, %arg9: memref<1x128xf32, #tpu.memory_space<vmem>>, %arg10: memref<16x128xf32, #tpu.memory_space<vmem>>) attributes {dimension_semantics = [#tpu.dimension_semantics<parallel>], iteration_bounds = array<i64: 4>, scalar_prefetch = 0 : i64, scratch_operands = 0 : i64, tpu.core_type = #tpu.core_type<tc>, window_params = [{transform_indices = @transform_0, window_bounds = array<i64: 16, 16>}, {pipeline_mode = #tpu.pipeline_mode<synchronous>, transform_indices = @transform_1, window_bounds = array<i64: 16, 32>}, {pipeline_mode = #tpu.pipeline_mode<synchronous>, transform_indices = @transform_2, window_bounds = array<i64: 1, 32>}, {pipeline_mode = #tpu.pipeline_mode<synchronous>, transform_indices = @transform_3, window_bounds = array<i64: 32, 32>}, {pipeline_mode = #tpu.pipeline_mode<synchronous>, transform_indices = @transform_4, window_bounds = array<i64: 1, 32>}, {pipeline_mode = #tpu.pipeline_mode<synchronous>, transform_indices = @transform_5, window_bounds = array<i64: 32, 32>}, {pipeline_mode = #tpu.pipeline_mode<synchronous>, transform_indices = @transform_6, window_bounds = array<i64: 1, 32>}, {pipeline_mode = #tpu.pipeline_mode<synchronous>, transform_indices = @transform_7, window_bounds = array<i64: 32, 128>}, {pipeline_mode = #tpu.pipeline_mode<synchronous>, transform_indices = @transform_8, window_bounds = array<i64: 1, 128>}, {transform_indices = @transform_9, window_bounds = array<i64: 16, 128>}]} {
    %c0 = arith.constant 0 : index
    %c0_0 = arith.constant 0 : index
    %0 = vector.load %arg1[%c0, %c0_0] : memref<16x16xbf16, #tpu.memory_space<vmem>>, vector<16x16xbf16>
    %c0_1 = arith.constant 0 : index
    %c0_2 = arith.constant 0 : index
    %1 = vector.load %arg2[%c0_1, %c0_2] : memref<16x32xbf16, #tpu.memory_space<vmem>>, vector<16x32xbf16>
    %cst = arith.constant dense<0.000000e+00> : vector<16x32xf32>
    %2 = tpu.matmul %0, %1, %cst {dimension_numbers = #tpu.dot_dimension_numbers<[1], [0], [0], [1], [0, 0, 1, 1], [], []>} : vector<16x16xbf16>, vector<16x32xbf16>, vector<16x32xf32> -> vector<16x32xf32>
    %c0_3 = arith.constant 0 : index
    %c0_4 = arith.constant 0 : index
    %3 = vector.load %arg3[%c0_3, %c0_4] : memref<1x32xf32, #tpu.memory_space<vmem>>, vector<1x32xf32>
    %4 = vector.broadcast %3 : vector<1x32xf32> to vector<16x32xf32>
    %5 = arith.addf %2, %4 : vector<16x32xf32>
    %cst_5 = arith.constant 0.000000e+00 : f32
    %6 = vector.broadcast %cst_5 : f32 to vector<16x32xf32>
    %7 = arith.maximumf %5, %6 : vector<16x32xf32>
    %8 = arith.truncf %7 : vector<16x32xf32> to vector<16x32xbf16>
    %c0_6 = arith.constant 0 : index
    %c0_7 = arith.constant 0 : index
    %9 = vector.load %arg4[%c0_6, %c0_7] : memref<32x32xbf16, #tpu.memory_space<vmem>>, vector<32x32xbf16>
    %cst_8 = arith.constant dense<0.000000e+00> : vector<16x32xf32>
    %10 = tpu.matmul %8, %9, %cst_8 {dimension_numbers = #tpu.dot_dimension_numbers<[1], [0], [0], [1], [0, 0, 1, 1], [], []>} : vector<16x32xbf16>, vector<32x32xbf16>, vector<16x32xf32> -> vector<16x32xf32>
    %c0_9 = arith.constant 0 : index
    %c0_10 = arith.constant 0 : index
    %11 = vector.load %arg5[%c0_9, %c0_10] : memref<1x32xf32, #tpu.memory_space<vmem>>, vector<1x32xf32>
    %12 = vector.broadcast %11 : vector<1x32xf32> to vector<16x32xf32>
    %13 = arith.addf %10, %12 : vector<16x32xf32>
    %cst_11 = arith.constant 0.000000e+00 : f32
    %14 = vector.broadcast %cst_11 : f32 to vector<16x32xf32>
    %15 = arith.maximumf %13, %14 : vector<16x32xf32>
    %16 = arith.truncf %15 : vector<16x32xf32> to vector<16x32xbf16>
    %c0_12 = arith.constant 0 : index
    %c0_13 = arith.constant 0 : index
    %17 = vector.load %arg6[%c0_12, %c0_13] : memref<32x32xbf16, #tpu.memory_space<vmem>>, vector<32x32xbf16>
    %cst_14 = arith.constant dense<0.000000e+00> : vector<16x32xf32>
    %18 = tpu.matmul %16, %17, %cst_14 {dimension_numbers = #tpu.dot_dimension_numbers<[1], [0], [0], [1], [0, 0, 1, 1], [], []>} : vector<16x32xbf16>, vector<32x32xbf16>, vector<16x32xf32> -> vector<16x32xf32>
    %c0_15 = arith.constant 0 : index
    %c0_16 = arith.constant 0 : index
    %19 = vector.load %arg7[%c0_15, %c0_16] : memref<1x32xf32, #tpu.memory_space<vmem>>, vector<1x32xf32>
    %20 = vector.broadcast %19 : vector<1x32xf32> to vector<16x32xf32>
    %21 = arith.addf %18, %20 : vector<16x32xf32>
    %cst_17 = arith.constant 0.000000e+00 : f32
    %22 = vector.broadcast %cst_17 : f32 to vector<16x32xf32>
    %23 = arith.maximumf %21, %22 : vector<16x32xf32>
    %24 = arith.truncf %23 : vector<16x32xf32> to vector<16x32xbf16>
    %c0_18 = arith.constant 0 : index
    %c0_19 = arith.constant 0 : index
    %25 = vector.load %arg8[%c0_18, %c0_19] : memref<32x128xbf16, #tpu.memory_space<vmem>>, vector<32x128xbf16>
    %cst_20 = arith.constant dense<0.000000e+00> : vector<16x128xf32>
    %26 = tpu.matmul %24, %25, %cst_20 {dimension_numbers = #tpu.dot_dimension_numbers<[1], [0], [0], [1], [0, 0, 1, 1], [], []>} : vector<16x32xbf16>, vector<32x128xbf16>, vector<16x128xf32> -> vector<16x128xf32>
    %c0_21 = arith.constant 0 : index
    %c0_22 = arith.constant 0 : index
    %27 = vector.load %arg9[%c0_21, %c0_22] : memref<1x128xf32, #tpu.memory_space<vmem>>, vector<1x128xf32>
    %28 = vector.broadcast %27 : vector<1x128xf32> to vector<16x128xf32>
    %29 = arith.addf %26, %28 : vector<16x128xf32>
    %c0_23 = arith.constant 0 : index
    %c0_24 = arith.constant 0 : index
    %30 = vector.load %arg10[%c0_23, %c0_24] : memref<16x128xf32, #tpu.memory_space<vmem>>, vector<16x128xf32>
    tpu.vector_store %arg10[%c0_23, %c0_24], %29 {strides = array<i32>} : memref<16x128xf32, #tpu.memory_space<vmem>>, vector<16x128xf32>,
    return
  }
  func.func @transform_0(%arg0: i32) -> (i32, i32) {
    %c0_i32 = arith.constant 0 : i32
    %c0_i32_0 = arith.constant 0 : i32
    return %arg0, %c0_i32 : i32, i32
  }
  func.func @transform_1(%arg0: i32) -> (i32, i32) {
    %c0_i32 = arith.constant 0 : i32
    %c0_i32_0 = arith.constant 0 : i32
    %c0_i32_1 = arith.constant 0 : i32
    return %c0_i32, %c0_i32_0 : i32, i32
  }
  func.func @transform_2(%arg0: i32) -> (i32, i32) {
    %c0_i32 = arith.constant 0 : i32
    %c0_i32_0 = arith.constant 0 : i32
    %c0_i32_1 = arith.constant 0 : i32
    return %c0_i32, %c0_i32_0 : i32, i32
  }
  func.func @transform_3(%arg0: i32) -> (i32, i32) {
    %c0_i32 = arith.constant 0 : i32
    %c0_i32_0 = arith.constant 0 : i32
    %c0_i32_1 = arith.constant 0 : i32
    return %c0_i32, %c0_i32_0 : i32, i32
  }
  func.func @transform_4(%arg0: i32) -> (i32, i32) {
    %c0_i32 = arith.constant 0 : i32
    %c0_i32_0 = arith.constant 0 : i32
    %c0_i32_1 = arith.constant 0 : i32
    return %c0_i32, %c0_i32_0 : i32, i32
  }
  func.func @transform_5(%arg0: i32) -> (i32, i32) {
    %c0_i32 = arith.constant 0 : i32
    %c0_i32_0 = arith.constant 0 : i32
    %c0_i32_1 = arith.constant 0 : i32
    return %c0_i32, %c0_i32_0 : i32, i32
  }
  func.func @transform_6(%arg0: i32) -> (i32, i32) {
    %c0_i32 = arith.constant 0 : i32
    %c0_i32_0 = arith.constant 0 : i32
    %c0_i32_1 = arith.constant 0 : i32
    return %c0_i32, %c0_i32_0 : i32, i32
  }
  func.func @transform_7(%arg0: i32) -> (i32, i32) {
    %c0_i32 = arith.constant 0 : i32
    %c0_i32_0 = arith.constant 0 : i32
    %c0_i32_1 = arith.constant 0 : i32
    return %c0_i32, %c0_i32_0 : i32, i32
  }
  func.func @transform_8(%arg0: i32) -> (i32, i32) {
    %c0_i32 = arith.constant 0 : i32
    %c0_i32_0 = arith.constant 0 : i32
    %c0_i32_1 = arith.constant 0 : i32
    return %c0_i32, %c0_i32_0 : i32, i32
  }
  func.func @transform_9(%arg0: i32) -> (i32, i32) {
    %c0_i32 = arith.constant 0 : i32
    %c0_i32_0 = arith.constant 0 : i32
    return %arg0, %c0_i32 : i32, i32
  }
}

module attributes {stable_mosaic.version = 11 : i64} {
  func.func @mlp_kernel(%arg0: i32, %arg1: memref<16x16xbf16, #tpu.memory_space<vmem>>, %arg2: memref<16x32xbf16, #tpu.memory_space<vmem>>, %arg3: memref<1x32xf32, #tpu.memory_space<vmem>>, %arg4: memref<32x32xbf16, #tpu.memory_space<vmem>>, %arg5: memref<1x32xf32, #tpu.memory_space<vmem>>, %arg6: memref<32x32xbf16, #tpu.memory_space<vmem>>, %arg7: memref<1x32xf32, #tpu.memory_space<vmem>>, %arg8: memref<32x128xbf16, #tpu.memory_space<vmem>>, %arg9: memref<1x128xf32, #tpu.memory_space<vmem>>, %arg10: memref<16x128xf32, #tpu.memory_space<vmem>>) attributes {dimension_semantics = [#tpu.dimension_semantics<parallel>], iteration_bounds = array<i64: 4>, scalar_prefetch = 0 : i64, scratch_operands = 0 : i64, tpu.core_type = #tpu.core_type<tc>, window_params = [{transform_indices = @transform_0, window_bounds = array<i64: 16, 16>}, {pipeline_mode = #tpu.pipeline_mode<synchronous>, transform_indices = @transform_1, window_bounds = array<i64: 16, 32>}, {pipeline_mode = #tpu.pipeline_mode<synchronous>, transform_indices = @transform_2, window_bounds = array<i64: 1, 32>}, {pipeline_mode = #tpu.pipeline_mode<synchronous>, transform_indices = @transform_3, window_bounds = array<i64: 32, 32>}, {pipeline_mode = #tpu.pipeline_mode<synchronous>, transform_indices = @transform_4, window_bounds = array<i64: 1, 32>}, {pipeline_mode = #tpu.pipeline_mode<synchronous>, transform_indices = @transform_5, window_bounds = array<i64: 32, 32>}, {pipeline_mode = #tpu.pipeline_mode<synchronous>, transform_indices = @transform_6, window_bounds = array<i64: 1, 32>}, {pipeline_mode = #tpu.pipeline_mode<synchronous>, transform_indices = @transform_7, window_bounds = array<i64: 32, 128>}, {pipeline_mode = #tpu.pipeline_mode<synchronous>, transform_indices = @transform_8, window_bounds = array<i64: 1, 128>}, {transform_indices = @transform_9, window_bounds = array<i64: 16, 128>}]} {
    %c0 = arith.constant 0 : index
    %c0_0 = arith.constant 0 : index
    %0 = vector.load %arg1[%c0, %c0_0] : memref<16x16xbf16, #tpu.memory_space<vmem>>, vector<16x16xbf16>
    %c0_1 = arith.constant 0 : index
    %c0_2 = arith.constant 0 : index
    %1 = vector.load %arg2[%c0_1, %c0_2] : memref<16x32xbf16, #tpu.memory_space<vmem>>, vector<16x32xbf16>
    %cst = arith.constant dense<0.000000e+00> : vector<16x32xf32>
    %2 = tpu.matmul %0, %1, %cst {dimension_numbers = #tpu.dot_dimension_numbers<[1], [0], [0], [1], [0, 0, 1, 1], [], []>} : vector<16x16xbf16>, vector<16x32xbf16>, vector<16x32xf32> -> vector<16x32xf32>
    %c0_3 = arith.constant 0 : index
    %c0_4 = arith.constant 0 : index
    %3 = vector.load %arg3[%c0_3, %c0_4] : memref<1x32xf32, #tpu.memory_space<vmem>>, vector<1x32xf32>
    %4 = vector.broadcast %3 : vector<1x32xf32> to vector<16x32xf32>
    %5 = arith.addf %2, %4 : vector<16x32xf32>
    %cst_5 = arith.constant 0.000000e+00 : f32
    %6 = vector.broadcast %cst_5 : f32 to vector<16x32xf32>
    %7 = arith.maximumf %5, %6 : vector<16x32xf32>
    %8 = arith.truncf %7 : vector<16x32xf32> to vector<16x32xbf16>
    %c0_6 = arith.constant 0 : index
    %c0_7 = arith.constant 0 : index
    %9 = vector.load %arg4[%c0_6, %c0_7] : memref<32x32xbf16, #tpu.memory_space<vmem>>, vector<32x32xbf16>
    %cst_8 = arith.constant dense<0.000000e+00> : vector<16x32xf32>
    %10 = tpu.matmul %8, %9, %cst_8 {dimension_numbers = #tpu.dot_dimension_numbers<[1], [0], [0], [1], [0, 0, 1, 1], [], []>} : vector<16x32xbf16>, vector<32x32xbf16>, vector<16x32xf32> -> vector<16x32xf32>
    %c0_9 = arith.constant 0 : index
    %c0_10 = arith.constant 0 : index
    %11 = vector.load %arg5[%c0_9, %c0_10] : memref<1x32xf32, #tpu.memory_space<vmem>>, vector<1x32xf32>
    %12 = vector.broadcast %11 : vector<1x32xf32> to vector<16x32xf32>
    %13 = arith.addf %10, %12 : vector<16x32xf32>
    %cst_11 = arith.constant 0.000000e+00 : f32
    %14 = vector.broadcast %cst_11 : f32 to vector<16x32xf32>
    %15 = arith.maximumf %13, %14 : vector<16x32xf32>
    %16 = arith.truncf %15 : vector<16x32xf32> to vector<16x32xbf16>
    %c0_12 = arith.constant 0 : index
    %c0_13 = arith.constant 0 : index
    %17 = vector.load %arg6[%c0_12, %c0_13] : memref<32x32xbf16, #tpu.memory_space<vmem>>, vector<32x32xbf16>
    %cst_14 = arith.constant dense<0.000000e+00> : vector<16x32xf32>
    %18 = tpu.matmul %16, %17, %cst_14 {dimension_numbers = #tpu.dot_dimension_numbers<[1], [0], [0], [1], [0, 0, 1, 1], [], []>} : vector<16x32xbf16>, vector<32x32xbf16>, vector<16x32xf32> -> vector<16x32xf32>
    %c0_15 = arith.constant 0 : index
    %c0_16 = arith.constant 0 : index
    %19 = vector.load %arg7[%c0_15, %c0_16] : memref<1x32xf32, #tpu.memory_space<vmem>>, vector<1x32xf32>
    %20 = vector.broadcast %19 : vector<1x32xf32> to vector<16x32xf32>
    %21 = arith.addf %18, %20 : vector<16x32xf32>
    %cst_17 = arith.constant 0.000000e+00 : f32
    %22 = vector.broadcast %cst_17 : f32 to vector<16x32xf32>
    %23 = arith.maximumf %21, %22 : vector<16x32xf32>
    %24 = arith.truncf %23 : vector<16x32xf32> to vector<16x32xbf16>
    %c0_18 = arith.constant 0 : index
    %c0_19 = arith.constant 0 : index
    %25 = vector.load %arg8[%c0_18, %c0_19] : memref<32x128xbf16, #tpu.memory_space<vmem>>, vector<32x128xbf16>
    %cst_20 = arith.constant dense<0.000000e+00> : vector<16x128xf32>
    %26 = tpu.matmul %24, %25, %cst_20 {dimension_numbers = #tpu.dot_dimension_numbers<[1], [0], [0], [1], [0, 0, 1, 1], [], []>} : vector<16x32xbf16>, vector<32x128xbf16>, vector<16x128xf32> -> vector<16x128xf32>
    %c0_21 = arith.constant 0 : index
    %c0_22 = arith.constant 0 : index
    %27 = vector.load %arg9[%c0_21, %c0_22] : memref<1x128xf32, #tpu.memory_space<vmem>>, vector<1x128xf32>
    %28 = vector.broadcast %27 : vector<1x128xf32> to vector<16x128xf32>
    %29 = arith.addf %26, %28 : vector<16x128xf32>
    %c0_23 = arith.constant 0 : index
    %c0_24 = arith.constant 0 : index
    %30 = vector.load %arg10[%c0_23, %c0_24] : memref<16x128xf32, #tpu.memory_space<vmem>>, vector<16x128xf32>
    tpu.vector_store %arg10[%c0_23, %c0_24], %29 {strides = array<i32>} : memref<16x128xf32, #tpu.memory_space<vmem>>, vector<16x128xf32>,
    return
  }
  func.func @transform_0(%arg0: i32) -> (i32, i32) {
    %c0_i32 = arith.constant 0 : i32
    %c0_i32_0 = arith.constant 0 : i32
    return %arg0, %c0_i32 : i32, i32
  }
  func.func @transform_1(%arg0: i32) -> (i32, i32) {
    %c0_i32 = arith.constant 0 : i32
    %c0_i32_0 = arith.constant 0 : i32
    %c0_i32_1 = arith.constant 0 : i32
    return %c0_i32, %c0_i32_0 : i32, i32
  }
  func.func @transform_2(%arg0: i32) -> (i32, i32) {
    %c0_i32 = arith.constant 0 : i32
    %c0_i32_0 = arith.constant 0 : i32
    %c0_i32_1 = arith.constant 0 : i32
    return %c0_i32, %c0_i32_0 : i32, i32
  }
  func.func @transform_3(%arg0: i32) -> (i32, i32) {
    %c0_i32 = arith.constant 0 : i32
    %c0_i32_0 = arith.constant 0 : i32
    %c0_i32_1 = arith.constant 0 : i32
    return %c0_i32, %c0_i32_0 : i32, i32
  }
  func.func @transform_4(%arg0: i32) -> (i32, i32) {
    %c0_i32 = arith.constant 0 : i32
    %c0_i32_0 = arith.constant 0 : i32
    %c0_i32_1 = arith.constant 0 : i32
    return %c0_i32, %c0_i32_0 : i32, i32
  }
  func.func @transform_5(%arg0: i32) -> (i32, i32) {
    %c0_i32 = arith.constant 0 : i32
    %c0_i32_0 = arith.constant 0 : i32
    %c0_i32_1 = arith.constant 0 : i32
    return %c0_i32, %c0_i32_0 : i32, i32
  }
  func.func @transform_6(%arg0: i32) -> (i32, i32) {
    %c0_i32 = arith.constant 0 : i32
    %c0_i32_0 = arith.constant 0 : i32
    %c0_i32_1 = arith.constant 0 : i32
    return %c0_i32, %c0_i32_0 : i32, i32
  }
  func.func @transform_7(%arg0: i32) -> (i32, i32) {
    %c0_i32 = arith.constant 0 : i32
    %c0_i32_0 = arith.constant 0 : i32
    %c0_i32_1 = arith.constant 0 : i32
    return %c0_i32, %c0_i32_0 : i32, i32
  }
  func.func @transform_8(%arg0: i32) -> (i32, i32) {
    %c0_i32 = arith.constant 0 : i32
    %c0_i32_0 = arith.constant 0 : i32
    %c0_i32_1 = arith.constant 0 : i32
    return %c0_i32, %c0_i32_0 : i32, i32
  }
  func.func @transform_9(%arg0: i32) -> (i32, i32) {
    %c0_i32 = arith.constant 0 : i32
    %c0_i32_0 = arith.constant 0 : i32
    return %arg0, %c0_i32 : i32, i32
  }
}

</mosaic_0001>

<llo_original>
// kernel: tpu_custom_call.1
$region0: #{tpu_custom_call.1}
  #allocation0 [shape = 'u32[]', space=smem, size = 0x4, offset = 0x4, fixed_abs, tag = 'smem constant byte address 0x4 - core index']
  #allocation1 [shape = 'u32[144,128]{1,0:T(1,128)}', space=vmem, size = 0x12000, scoped, tag = 'internal scratch']
  %s0 = inlined_call_operand.vmem [shape: bf16[64,16], index: 0, kind: input, shape index: {}]
  %s1 = inlined_call_operand.hbm [shape: bf16[16,32], index: 1, kind: input, shape index: {}]
  %s2 = inlined_call_operand.vmem [shape: f32[1,32], index: 2, kind: input, shape index: {}]
  %s3 = inlined_call_operand.vmem [shape: bf16[32,32], index: 3, kind: input, shape index: {}]
  %s4 = inlined_call_operand.vmem [shape: f32[1,32], index: 4, kind: input, shape index: {}]
  %s5 = inlined_call_operand.vmem [shape: bf16[32,32], index: 5, kind: input, shape index: {}]
  %s6 = inlined_call_operand.vmem [shape: f32[1,32], index: 6, kind: input, shape index: {}]
  %s7 = inlined_call_operand.vmem [shape: bf16[32,128], index: 7, kind: input, shape index: {}]
  %s8 = inlined_call_operand.vmem [shape: f32[1,128], index: 8, kind: input, shape index: {}]
  %s9 = inlined_call_operand.hbm [shape: f32[64,128], index: 9, kind: output, shape index: {}]
  %s10 = sld [smem:[#allocation0]]
  $region73: #{tpu_custom_call.1} parent=0
    _
  %s12 = ssub.s32 1, %s10
  %s13 = scalar_select 0, %s12, %s10
  $region1: #{tpu_custom_call.1} parent=0
    #allocation2 [shape = 'u8[4096]{0}', space=vmem, size = 0x1000, scoped, tag = 'input window, operand 1, single buffered']
    #allocation3 [shape = 's32[2]{0}', space=sflag, size = 0x8, scoped, tag = 'scoped memory for tpu_custom_call.1']
    #allocation4 [shape = 's32[2]{0}', space=sflag, size = 0x8, scoped, tag = 'scoped memory for tpu_custom_call.1']
    #allocation5 [shape = 'u8[16384]{0}', space=vmem, size = 0x4000, scoped, tag = 'output window, operand 0']
    %14 = vsyncpa [#allocation3], 0
    %15 = vsyncpa [#allocation4], 0
    %s16 = scalar_lea.sflag [#allocation4], 1
    %17 = vsyncpa %s16, 0
    loop: start=0, step=1, limit=6
    $region2: #{tpu_custom_call.1} parent=1 // loop_pre_header
      _
    $region3: #{tpu_custom_call.1} parent=1 // loop_header
      %s19 = sphi 0, %s23
      %p20 = scmp.ge.s32.totalorder %s19, 6
      %s29 = sphi 0, %s31
      %s32 = sphi 0, %s29
      %s33 = sphi 0, %s32
      %s49 = sphi 0, %s33
      %s53 = sphi 0, %s53
      %s55 = sphi 0, %s53
      %s56 = sphi 0, %s55
      %s70 = sphi 0, %s56
      %s74 = sphi 0, %s74
      %s76 = sphi 0, %s74
      %s77 = sphi 0, %s76
      %s91 = sphi 0, %s77
      %s95 = sphi 0, %s95
      %s97 = sphi 0, %s95
      %s98 = sphi 0, %s97
      %s112 = sphi 0, %s98
      %s116 = sphi 0, %s116
      %s118 = sphi 0, %s116
      %s119 = sphi 0, %s118
      %s133 = sphi 0, %s119
      %s137 = sphi 0, %s137
      %s139 = sphi 0, %s137
      %s140 = sphi 0, %s139
      %s154 = sphi 0, %s140
      %s158 = sphi 0, %s158
      %s160 = sphi 0, %s158
      %s161 = sphi 0, %s160
      %s175 = sphi 0, %s161
      %s179 = sphi 0, %s179
      %s181 = sphi 0, %s179
      %s182 = sphi 0, %s181
      %s196 = sphi 0, %s182
      %s200 = sphi 0, %s200
      %s202 = sphi 0, %s200
      %s203 = sphi 0, %s202
      %s217 = sphi 0, %s203
      %s223 = sphi 0, %s225
      %s226 = sphi 0, %s223
      %s227 = sphi 0, %s226
      %s243 = sphi 0, %s227
    $region4: #{tpu_custom_call.1} parent=1 // loop_header_branch
      %22 = sbr.rel (%p20) target = $region8
    $region5: #{tpu_custom_call.1} parent=1 // loop_body
      %s24 = ssub.s32 %s19, 1
      %s25 = ssub.s32 %s19, 2
      %s26 = sadd.s32 %s19, 1
      %s27 = ssub.s32 %s19, %s26
      %p28 = scmp.eq.s32.totalorder %s27, 0
      %s30 = sadd.s32 %s29, 1
      %s31 = scalar_select %p28, %s29, %s30
      %p34 = pneg %p28
      %p35 = scmp.eq.s32.totalorder %s19, 3
      %p36 = por %p34, %p35
      %p37 = scmp.ne.s32.totalorder %s29, %s32
      %p38 = scmp.eq.s32.totalorder %s19, 0
      %p39 = por %p37, %p38
      %p40 = scmp.ne.s32.totalorder %s29, %s32
      %p41 = scmp.eq.s32.totalorder %s24, 3
      %p42 = por %p40, %p41
      %p43 = scmp.ne.s32.totalorder %s32, %s33
      %p44 = scmp.eq.s32.totalorder %s24, 0
      %p45 = por %p43, %p44
      %p46 = scmp.ne.s32.totalorder %s32, %s33
      %p47 = scmp.eq.s32.totalorder %s25, 3
      %p48 = por %p46, %p47
      %p50 = scmp.ne.s32.totalorder %s33, %s49
      %p51 = scmp.eq.s32.totalorder %s25, 0
      %p52 = por %p50, %p51
      %s54 = sadd.s32 %s53, 1
      %p57 = scmp.eq.s32.totalorder %s19, 3
      %p58 = scmp.ne.s32.totalorder %s53, %s55
      %p59 = scmp.eq.s32.totalorder %s19, 0
      %p60 = por %p58, %p59
      %p61 = scmp.ne.s32.totalorder %s53, %s55
      %p62 = scmp.eq.s32.totalorder %s24, 3
      %p63 = por %p61, %p62
      %p64 = scmp.ne.s32.totalorder %s55, %s56
      %p65 = scmp.eq.s32.totalorder %s24, 0
      %p66 = por %p64, %p65
      %p67 = scmp.ne.s32.totalorder %s55, %s56
      %p68 = scmp.eq.s32.totalorder %s25, 3
      %p69 = por %p67, %p68
      %p71 = scmp.ne.s32.totalorder %s56, %s70
      %p72 = scmp.eq.s32.totalorder %s25, 0
      %p73 = por %p71, %p72
      %s75 = sadd.s32 %s74, 1
      %p78 = scmp.eq.s32.totalorder %s19, 3
      %p79 = scmp.ne.s32.totalorder %s74, %s76
      %p80 = scmp.eq.s32.totalorder %s19, 0
      %p81 = por %p79, %p80
      %p82 = scmp.ne.s32.totalorder %s74, %s76
      %p83 = scmp.eq.s32.totalorder %s24, 3
      %p84 = por %p82, %p83
      %p85 = scmp.ne.s32.totalorder %s76, %s77
      %p86 = scmp.eq.s32.totalorder %s24, 0
      %p87 = por %p85, %p86
      %p88 = scmp.ne.s32.totalorder %s76, %s77
      %p89 = scmp.eq.s32.totalorder %s25, 3
      %p90 = por %p88, %p89
      %p92 = scmp.ne.s32.totalorder %s77, %s91
      %p93 = scmp.eq.s32.totalorder %s25, 0
      %p94 = por %p92, %p93
      %s96 = sadd.s32 %s95, 1
      %p99 = scmp.eq.s32.totalorder %s19, 3
      %p100 = scmp.ne.s32.totalorder %s95, %s97
      %p101 = scmp.eq.s32.totalorder %s19, 0
      %p102 = por %p100, %p101
      %p103 = scmp.ne.s32.totalorder %s95, %s97
      %p104 = scmp.eq.s32.totalorder %s24, 3
      %p105 = por %p103, %p104
      %p106 = scmp.ne.s32.totalorder %s97, %s98
      %p107 = scmp.eq.s32.totalorder %s24, 0
      %p108 = por %p106, %p107
      %p109 = scmp.ne.s32.totalorder %s97, %s98
      %p110 = scmp.eq.s32.totalorder %s25, 3
      %p111 = por %p109, %p110
      %p113 = scmp.ne.s32.totalorder %s98, %s112
      %p114 = scmp.eq.s32.totalorder %s25, 0
      %p115 = por %p113, %p114
      %s117 = sadd.s32 %s116, 1
      %p120 = scmp.eq.s32.totalorder %s19, 3
      %p121 = scmp.ne.s32.totalorder %s116, %s118
      %p122 = scmp.eq.s32.totalorder %s19, 0
      %p123 = por %p121, %p122
      %p124 = scmp.ne.s32.totalorder %s116, %s118
      %p125 = scmp.eq.s32.totalorder %s24, 3
      %p126 = por %p124, %p125
      %p127 = scmp.ne.s32.totalorder %s118, %s119
      %p128 = scmp.eq.s32.totalorder %s24, 0
      %p129 = por %p127, %p128
      %p130 = scmp.ne.s32.totalorder %s118, %s119
      %p131 = scmp.eq.s32.totalorder %s25, 3
      %p132 = por %p130, %p131
      %p134 = scmp.ne.s32.totalorder %s119, %s133
      %p135 = scmp.eq.s32.totalorder %s25, 0
      %p136 = por %p134, %p135
      %s138 = sadd.s32 %s137, 1
      %p141 = scmp.eq.s32.totalorder %s19, 3
      %p142 = scmp.ne.s32.totalorder %s137, %s139
      %p143 = scmp.eq.s32.totalorder %s19, 0
      %p144 = por %p142, %p143
      %p145 = scmp.ne.s32.totalorder %s137, %s139
      %p146 = scmp.eq.s32.totalorder %s24, 3
      %p147 = por %p145, %p146
      %p148 = scmp.ne.s32.totalorder %s139, %s140
      %p149 = scmp.eq.s32.totalorder %s24, 0
      %p150 = por %p148, %p149
      %p151 = scmp.ne.s32.totalorder %s139, %s140
      %p152 = scmp.eq.s32.totalorder %s25, 3
      %p153 = por %p151, %p152
      %p155 = scmp.ne.s32.totalorder %s140, %s154
      %p156 = scmp.eq.s32.totalorder %s25, 0
      %p157 = por %p155, %p156
      %s159 = sadd.s32 %s158, 1
      %p162 = scmp.eq.s32.totalorder %s19, 3
      %p163 = scmp.ne.s32.totalorder %s158, %s160
      %p164 = scmp.eq.s32.totalorder %s19, 0
      %p165 = por %p163, %p164
      %p166 = scmp.ne.s32.totalorder %s158, %s160
      %p167 = scmp.eq.s32.totalorder %s24, 3
      %p168 = por %p166, %p167
      %p169 = scmp.ne.s32.totalorder %s160, %s161
      %p170 = scmp.eq.s32.totalorder %s24, 0
      %p171 = por %p169, %p170
      %p172 = scmp.ne.s32.totalorder %s160, %s161
      %p173 = scmp.eq.s32.totalorder %s25, 3
      %p174 = por %p172, %p173
      %p176 = scmp.ne.s32.totalorder %s161, %s175
      %p177 = scmp.eq.s32.totalorder %s25, 0
      %p178 = por %p176, %p177
      %s180 = sadd.s32 %s179, 1
      %p183 = scmp.eq.s32.totalorder %s19, 3
      %p184 = scmp.ne.s32.totalorder %s179, %s181
      %p185 = scmp.eq.s32.totalorder %s19, 0
      %p186 = por %p184, %p185
      %p187 = scmp.ne.s32.totalorder %s179, %s181
      %p188 = scmp.eq.s32.totalorder %s24, 3
      %p189 = por %p187, %p188
      %p190 = scmp.ne.s32.totalorder %s181, %s182
      %p191 = scmp.eq.s32.totalorder %s24, 0
      %p192 = por %p190, %p191
      %p193 = scmp.ne.s32.totalorder %s181, %s182
      %p194 = scmp.eq.s32.totalorder %s25, 3
      %p195 = por %p193, %p194
      %p197 = scmp.ne.s32.totalorder %s182, %s196
      %p198 = scmp.eq.s32.totalorder %s25, 0
      %p199 = por %p197, %p198
      %s201 = sadd.s32 %s200, 1
      %p204 = scmp.eq.s32.totalorder %s19, 3
      %p205 = scmp.ne.s32.totalorder %s200, %s202
      %p206 = scmp.eq.s32.totalorder %s19, 0
      %p207 = por %p205, %p206
      %p208 = scmp.ne.s32.totalorder %s200, %s202
      %p209 = scmp.eq.s32.totalorder %s24, 3
      %p210 = por %p208, %p209
      %p211 = scmp.ne.s32.totalorder %s202, %s203
      %p212 = scmp.eq.s32.totalorder %s24, 0
      %p213 = por %p211, %p212
      %p214 = scmp.ne.s32.totalorder %s202, %s203
      %p215 = scmp.eq.s32.totalorder %s25, 3
      %p216 = por %p214, %p215
      %p218 = scmp.ne.s32.totalorder %s203, %s217
      %p219 = scmp.eq.s32.totalorder %s25, 0
      %p220 = por %p218, %p219
      %s221 = ssub.s32 %s19, %s26
      %p222 = scmp.eq.s32.totalorder %s221, 0
      %s224 = sadd.s32 %s223, 1
      %s225 = scalar_select %p222, %s223, %s224
      %p228 = pneg %p222
      %p229 = scmp.eq.s32.totalorder %s19, 3
      %p230 = por %p228, %p229
      %p231 = scmp.ne.s32.totalorder %s223, %s226
      %p232 = scmp.eq.s32.totalorder %s19, 0
      %p233 = por %p231, %p232
      %p234 = scmp.ne.s32.totalorder %s223, %s226
      %p235 = scmp.eq.s32.totalorder %s24, 3
      %p236 = por %p234, %p235
      %p237 = scmp.ne.s32.totalorder %s226, %s227
      %p238 = scmp.eq.s32.totalorder %s24, 0
      %p239 = por %p237, %p238
      %p240 = scmp.ne.s32.totalorder %s226, %s227
      %p241 = scmp.eq.s32.totalorder %s25, 3
      %p242 = por %p240, %p241
      %p244 = scmp.ne.s32.totalorder %s227, %s243
      %p245 = scmp.eq.s32.totalorder %s25, 0
      %p246 = por %p244, %p245
      %p247 = scmp.le.s32.totalorder 1, %s19
      %p248 = scmp.lt.s32.totalorder %s19, 5
      %p249 = pnand %p247, %p248
      %p250 = pneg %p249
      // Predicated region
      $region9: #{tpu_custom_call.1} parent=5 // pred_check
        _
      $region10: #{tpu_custom_call.1} parent=5 // pred_check_branch
        %252 = sbr.rel (%p249) target = $region12
      $region11: #{tpu_custom_call.1} parent=5 // pred_region
        %s253 = ssub.s32 %s19, 1
        // Predicated region
        $region13: #{tpu_custom_call.1} parent=11 // pred_check
          %p254 = pneg %p66
        $region14: #{tpu_custom_call.1} parent=11 // pred_check_branch
          %256 = sbr.rel (%p254) target = $region16
        $region15: #{tpu_custom_call.1} parent=11 // pred_region
          %s258 = ssub.s32 128, 128
          %259 = vsyncadd [#allocation3], %s258
          %s260 = sshll.u32 [#allocation2], 4
          %s261 = int_to_ptr.vmem [resolvable:$true] %s260
          %266 = dma.hbm_to_vmem [thread:$0]  %s1, 128, %s261, [#allocation3], 64, 64, 4
        $region16: #{tpu_custom_call.1} parent=11 // pred_fallthru
          _
        // Predicated region
        $region17: #{tpu_custom_call.1} parent=11 // pred_check
          %p267 = pneg %p87
        $region18: #{tpu_custom_call.1} parent=11 // pred_check_branch
          %269 = sbr.rel (%p267) target = $region20
        $region19: #{tpu_custom_call.1} parent=11 // pred_region
          _
        $region20: #{tpu_custom_call.1} parent=11 // pred_fallthru
          _
        // Predicated region
        $region21: #{tpu_custom_call.1} parent=11 // pred_check
          %p270 = pneg %p108
        $region22: #{tpu_custom_call.1} parent=11 // pred_check_branch
          %272 = sbr.rel (%p270) target = $region24
        $region23: #{tpu_custom_call.1} parent=11 // pred_region
          _
        $region24: #{tpu_custom_call.1} parent=11 // pred_fallthru
          _
        // Predicated region
        $region25: #{tpu_custom_call.1} parent=11 // pred_check
          %p273 = pneg %p129
        $region26: #{tpu_custom_call.1} parent=11 // pred_check_branch
          %275 = sbr.rel (%p273) target = $region28
        $region27: #{tpu_custom_call.1} parent=11 // pred_region
          _
        $region28: #{tpu_custom_call.1} parent=11 // pred_fallthru
          _
        // Predicated region
        $region29: #{tpu_custom_call.1} parent=11 // pred_check
          %p276 = pneg %p150
        $region30: #{tpu_custom_call.1} parent=11 // pred_check_branch
          %278 = sbr.rel (%p276) target = $region32
        $region31: #{tpu_custom_call.1} parent=11 // pred_region
          _
        $region32: #{tpu_custom_call.1} parent=11 // pred_fallthru
          _
        // Predicated region
        $region33: #{tpu_custom_call.1} parent=11 // pred_check
          %p279 = pneg %p171
        $region34: #{tpu_custom_call.1} parent=11 // pred_check_branch
          %281 = sbr.rel (%p279) target = $region36
        $region35: #{tpu_custom_call.1} parent=11 // pred_region
          _
        $region36: #{tpu_custom_call.1} parent=11 // pred_fallthru
          _
        // Predicated region
        $region37: #{tpu_custom_call.1} parent=11 // pred_check
          %p282 = pneg %p192
        $region38: #{tpu_custom_call.1} parent=11 // pred_check_branch
          %284 = sbr.rel (%p282) target = $region40
        $region39: #{tpu_custom_call.1} parent=11 // pred_region
          _
        $region40: #{tpu_custom_call.1} parent=11 // pred_fallthru
          _
        // Predicated region
        $region41: #{tpu_custom_call.1} parent=11 // pred_check
          %p285 = pneg %p213
        $region42: #{tpu_custom_call.1} parent=11 // pred_check_branch
          %287 = sbr.rel (%p285) target = $region44
        $region43: #{tpu_custom_call.1} parent=11 // pred_region
          _
        $region44: #{tpu_custom_call.1} parent=11 // pred_fallthru
          _
      $region12: #{tpu_custom_call.1} parent=5 // pred_fallthru
        _
      %p288 = scmp.lt.s32.totalorder %s19, 4
      // Predicated region
      $region45: #{tpu_custom_call.1} parent=5 // pred_check
        %p289 = pneg %p288
      $region46: #{tpu_custom_call.1} parent=5 // pred_check_branch
        %291 = sbr.rel (%p289) target = $region48
      $region47: #{tpu_custom_call.1} parent=5 // pred_region
        // Predicated region
        $region49: #{tpu_custom_call.1} parent=47 // pred_check
          %p292 = pneg %p39
        $region50: #{tpu_custom_call.1} parent=47 // pred_check_branch
          %294 = sbr.rel (%p292) target = $region52
        $region51: #{tpu_custom_call.1} parent=47 // pred_region
          %s295 = smul.u32 2, %s19
          %p296 = scmp.lt.s32.totalorder %s295, 7
          %s297 = scalar_select %p296, %s295, 7
          %s298 = smul.addr %s297, 4
          %s299 = scalar_lea.vmem %s0, %s298
          %s300 = smul.u32 2, %s19
        $region52: #{tpu_custom_call.1} parent=47 // pred_fallthru
          _
      $region48: #{tpu_custom_call.1} parent=5 // pred_fallthru
        _
      %p301 = scmp.le.s32.totalorder 1, %s19
      %p302 = scmp.lt.s32.totalorder %s19, 5
      %p303 = pnand %p301, %p302
      %p304 = pneg %p303
      // Predicated region
      $region53: #{tpu_custom_call.1} parent=5 // pred_check
        _
      $region54: #{tpu_custom_call.1} parent=5 // pred_check_branch
        %306 = sbr.rel (%p303) target = $region56
      $region55: #{tpu_custom_call.1} parent=5 // pred_region
        %s307 = ssub.s32 %s19, 1
        // Predicated region
        $region57: #{tpu_custom_call.1} parent=55 // pred_check
          %p308 = pneg %p66
        $region58: #{tpu_custom_call.1} parent=55 // pred_check_branch
          %310 = sbr.rel (%p308) target = $region60
        $region59: #{tpu_custom_call.1} parent=55 // pred_region
          %311 = dma.done [#allocation3], 128
        $region60: #{tpu_custom_call.1} parent=55 // pred_fallthru
          _
        %s312 = smul.u32 2, %s24
        %p313 = scmp.lt.s32.totalorder %s312, 7
        %s314 = scalar_select %p313, %s312, 7
        %s315 = smul.addr %s314, 4
        %s316 = scalar_lea.vmem %s0, %s315
        %p317 = pneg %p45
        %p318 = pneg %p42
        %p319 = pneg %p66
        %p320 = pneg %p63
        %p321 = pneg %p87
        %p322 = pneg %p84
        %p323 = pneg %p108
        %p324 = pneg %p105
        %p325 = pneg %p129
        %p326 = pneg %p126
        %p327 = pneg %p150
        %p328 = pneg %p147
        %p329 = pneg %p171
        %p330 = pneg %p168
        %p331 = pneg %p192
        %p332 = pneg %p189
        %p333 = pneg %p213
        %p334 = pneg %p210
        %p335 = pneg %p239
        %p336 = pneg %p236
        %s337 = sand.u32 %s226, 1
        %s338 = scalar_lea.sflag [#allocation4], %s337
        %s339 = sand.u32 %s226, 1
        %s340 = smul.addr %s339, 16
        %s341 = scalar_lea.vmem [#allocation5], %s340
        %s342 = smul.u32 2, %s24
        %p343 = scmp.lt.s32.totalorder %s342, 7
        %s344 = scalar_select %p343, %s342, 7
        %s345 = smul.addr %s344, 4
        %s346 = scalar_lea.vmem %s0, %s345
        %s347 = smul.u32 2, %s24
        %s348 = smul.u32 2, %s24
        %v350 = vld [vmem:[%s346] sm:$0xf]
        %v351 = vld [vmem:[%s346 + $0x4] sm:$0xf]
        %v352 = vld [vmem:[#allocation2] sm:$0xf]
        %v353 = vld [vmem:[#allocation2 + $0x4] sm:$0xf]
        %v354 = vld [vmem:[%s2] sm:$0x1]
        %v356 = vlaneseq
        %v357 = vshrl.u32 %v356, 7
        %v358 = vsub.s32 0, %v357
        %v359 = vrot.slane %v354, %v358
        %v363 = vunpack.c.l.b16 %v350
        %v364 = vunpack.c.l.b16 %v351
        %v365 = vpack.c.b16 %v364, %v363
        %v368 = vunpack.c.l.b16 %v352
        %v369 = vunpack.c.l.b16 %v353
        %v370 = vpack.c.b16 %v369, %v368
        %vm372 = vcmask 130048
        %v374 = vsel %vm372, %v365, 0
        %376 = vmatprep.subr.bf16.mxu0 0
        %377 = vmatpush1.bf16.msra.mxu0 %v370
        %378 = vmatprep.subr.bf16.mxu0 0
        %379 = vmatpush1.bf16.msra.mxu0 0
        %380 = vmatprep.subr.bf16.mxu0 0
        %381 = vmatpush1.bf16.msra.mxu0 0
        %382 = vmatprep.subr.bf16.mxu0 0
        %383 = vmatpush1.bf16.msra.mxu0 0
        %384 = vmatprep.subr.bf16.mxu0 0
        %385 = vmatpush1.bf16.msra.mxu0 0
        %386 = vmatprep.subr.bf16.mxu0 0
        %387 = vmatpush1.bf16.msra.mxu0 0
        %388 = vmatprep.subr.bf16.mxu0 0
        %389 = vmatpush1.bf16.msra.mxu0 0
        %390 = vmatprep.subr.bf16.mxu0 0
        %391 = vmatpush1.bf16.msra.mxu0 0
        %392 = vmatprep.subr.bf16.mxu0 0
        %393 = vmatpush1.bf16.msra.mxu0 0
        %394 = vmatprep.subr.bf16.mxu0 0
        %395 = vmatpush1.bf16.msra.mxu0 0
        %396 = vmatprep.subr.bf16.mxu0 0
        %397 = vmatpush1.bf16.msra.mxu0 0
        %398 = vmatprep.subr.bf16.mxu0 0
        %399 = vmatpush1.bf16.msra.mxu0 0
        %400 = vmatprep.subr.bf16.mxu0 0
        %401 = vmatpush1.bf16.msra.mxu0 0
        %402 = vmatprep.subr.bf16.mxu0 0
        %403 = vmatpush1.bf16.msra.mxu0 0
        %404 = vmatprep.subr.bf16.mxu0 0
        %405 = vmatpush1.bf16.msra.mxu0 0
        %406 = vmatprep.subr.bf16.mxu0 0
        %407 = vmatpush1.bf16.msra.mxu0 0
        %408 = vmatprep.mubr.bf16.mxu0 0
        %409 = vmatmul.mubr.bf16.gmra.mrb[0].mxu0 %v374
        %v410 = vpop.f32.mrb[0].mxu0
        %v411 = vadd.f32 %v359, %v410
        %v412 = vpop.f32.mrb[0].mxu0
        %v413 = vpop.f32.mrb[0].mxu0
        %v414 = vadd.f32 %v359, %v413
        %v415 = vpop.f32.mrb[0].mxu0
        %416 = vdwg.mxu0
        %v417 = vmax.f32 %v411, 0.0
        %v418 = vmax.f32 %v414, 0.0
        %v419 = vpack.c.bf16 %v418, %v417
        %v420 = vld [vmem:[%s3] sm:$0xf]
        %v421 = vld [vmem:[%s3 + $0x4] sm:$0xf]
        %v422 = vld [vmem:[%s3 + $0x8] sm:$0xf]
        %v423 = vld [vmem:[%s3 + $0xc] sm:$0xf]
        %v424 = vld [vmem:[%s4] sm:$0x1]
        %v426 = vlaneseq
        %v427 = vshrl.u32 %v426, 7
        %v428 = vsub.s32 0, %v427
        %v429 = vrot.slane %v424, %v428
        %v435 = vunpack.c.l.b16 %v420
        %v436 = vunpack.c.l.b16 %v421
        %v437 = vunpack.c.l.b16 %v422
        %v438 = vunpack.c.l.b16 %v423
        %v439 = vpack.c.b16 %v436, %v435
        %v440 = vpack.c.b16 %v438, %v437
        %vm443 = vcmask 261120
        %v445 = vsel %vm443, %v419, 0
        %447 = vmatprep.subr.bf16.mxu0 0
        %448 = vmatpush1.bf16.msra.mxu0 %v439
        %449 = vmatprep.subr.bf16.mxu0 0
        %450 = vmatpush1.bf16.msra.mxu0 %v440
        %451 = vmatprep.subr.bf16.mxu0 0
        %452 = vmatpush1.bf16.msra.mxu0 0
        %453 = vmatprep.subr.bf16.mxu0 0
        %454 = vmatpush1.bf16.msra.mxu0 0
        %455 = vmatprep.subr.bf16.mxu0 0
        %456 = vmatpush1.bf16.msra.mxu0 0
        %457 = vmatprep.subr.bf16.mxu0 0
        %458 = vmatpush1.bf16.msra.mxu0 0
        %459 = vmatprep.subr.bf16.mxu0 0
        %460 = vmatpush1.bf16.msra.mxu0 0
        %461 = vmatprep.subr.bf16.mxu0 0
        %462 = vmatpush1.bf16.msra.mxu0 0
        %463 = vmatprep.subr.bf16.mxu0 0
        %464 = vmatpush1.bf16.msra.mxu0 0
        %465 = vmatprep.subr.bf16.mxu0 0
        %466 = vmatpush1.bf16.msra.mxu0 0
        %467 = vmatprep.subr.bf16.mxu0 0
        %468 = vmatpush1.bf16.msra.mxu0 0
        %469 = vmatprep.subr.bf16.mxu0 0
        %470 = vmatpush1.bf16.msra.mxu0 0
        %471 = vmatprep.subr.bf16.mxu0 0
        %472 = vmatpush1.bf16.msra.mxu0 0
        %473 = vmatprep.subr.bf16.mxu0 0
        %474 = vmatpush1.bf16.msra.mxu0 0
        %475 = vmatprep.subr.bf16.mxu0 0
        %476 = vmatpush1.bf16.msra.mxu0 0
        %477 = vmatprep.subr.bf16.mxu0 0
        %478 = vmatpush1.bf16.msra.mxu0 0
        %479 = vmatprep.mubr.bf16.mxu0 0
        %480 = vmatmul.mubr.bf16.gmra.mrb[0].mxu0 %v445
        %v481 = vpop.f32.mrb[0].mxu0
        %v482 = vadd.f32 %v429, %v481
        %v483 = vpop.f32.mrb[0].mxu0
        %v484 = vpop.f32.mrb[0].mxu0
        %v485 = vadd.f32 %v429, %v484
        %v486 = vpop.f32.mrb[0].mxu0
        %487 = vdwg.mxu0
        %v488 = vmax.f32 %v482, 0.0
        %v489 = vmax.f32 %v485, 0.0
        %v490 = vpack.c.bf16 %v489, %v488
        %v491 = vld [vmem:[%s5] sm:$0xf]
        %v492 = vld [vmem:[%s5 + $0x4] sm:$0xf]
        %v493 = vld [vmem:[%s5 + $0x8] sm:$0xf]
        %v494 = vld [vmem:[%s5 + $0xc] sm:$0xf]
        %v495 = vld [vmem:[%s6] sm:$0x1]
        %v497 = vlaneseq
        %v498 = vshrl.u32 %v497, 7
        %v499 = vsub.s32 0, %v498
        %v500 = vrot.slane %v495, %v499
        %v506 = vunpack.c.l.b16 %v491
        %v507 = vunpack.c.l.b16 %v492
        %v508 = vunpack.c.l.b16 %v493
        %v509 = vunpack.c.l.b16 %v494
        %v510 = vpack.c.b16 %v507, %v506
        %v511 = vpack.c.b16 %v509, %v508
        %v515 = vsel %vm443, %v490, 0
        %517 = vmatprep.subr.bf16.mxu0 0
        %518 = vmatpush1.bf16.msra.mxu0 %v510
        %519 = vmatprep.subr.bf16.mxu0 0
        %520 = vmatpush1.bf16.msra.mxu0 %v511
        %521 = vmatprep.subr.bf16.mxu0 0
        %522 = vmatpush1.bf16.msra.mxu0 0
        %523 = vmatprep.subr.bf16.mxu0 0
        %524 = vmatpush1.bf16.msra.mxu0 0
        %525 = vmatprep.subr.bf16.mxu0 0
        %526 = vmatpush1.bf16.msra.mxu0 0
        %527 = vmatprep.subr.bf16.mxu0 0
        %528 = vmatpush1.bf16.msra.mxu0 0
        %529 = vmatprep.subr.bf16.mxu0 0
        %530 = vmatpush1.bf16.msra.mxu0 0
        %531 = vmatprep.subr.bf16.mxu0 0
        %532 = vmatpush1.bf16.msra.mxu0 0
        %533 = vmatprep.subr.bf16.mxu0 0
        %534 = vmatpush1.bf16.msra.mxu0 0
        %535 = vmatprep.subr.bf16.mxu0 0
        %536 = vmatpush1.bf16.msra.mxu0 0
        %537 = vmatprep.subr.bf16.mxu0 0
        %538 = vmatpush1.bf16.msra.mxu0 0
        %539 = vmatprep.subr.bf16.mxu0 0
        %540 = vmatpush1.bf16.msra.mxu0 0
        %541 = vmatprep.subr.bf16.mxu0 0
        %542 = vmatpush1.bf16.msra.mxu0 0
        %543 = vmatprep.subr.bf16.mxu0 0
        %544 = vmatpush1.bf16.msra.mxu0 0
        %545 = vmatprep.subr.bf16.mxu0 0
        %546 = vmatpush1.bf16.msra.mxu0 0
        %547 = vmatprep.subr.bf16.mxu0 0
        %548 = vmatpush1.bf16.msra.mxu0 0
        %549 = vmatprep.mubr.bf16.mxu0 0
        %550 = vmatmul.mubr.bf16.gmra.mrb[0].mxu0 %v515
        %v551 = vpop.f32.mrb[0].mxu0
        %v552 = vadd.f32 %v500, %v551
        %v553 = vpop.f32.mrb[0].mxu0
        %v554 = vpop.f32.mrb[0].mxu0
        %v555 = vadd.f32 %v500, %v554
        %v556 = vpop.f32.mrb[0].mxu0
        %557 = vdwg.mxu0
        %v558 = vmax.f32 %v552, 0.0
        %v559 = vmax.f32 %v555, 0.0
        %v560 = vpack.c.bf16 %v559, %v558
        %v561 = vld [vmem:[%s7] sm:$0xf]
        %v562 = vld [vmem:[%s7 + $0x4] sm:$0xf]
        %v563 = vld [vmem:[%s7 + $0x8] sm:$0xf]
        %v564 = vld [vmem:[%s7 + $0xc] sm:$0xf]
        %v565 = vld [vmem:[%s8] sm:$0x1]
        %v567 = vlaneseq
        %v568 = vshrl.u32 %v567, 7
        %v569 = vsub.s32 0, %v568
        %v570 = vrot.slane %v565, %v569
        %v576 = vunpack.c.l.b16 %v561
        %v577 = vunpack.c.l.b16 %v562
        %v578 = vunpack.c.l.b16 %v563
        %v579 = vunpack.c.l.b16 %v564
        %v580 = vpack.c.b16 %v577, %v576
        %v581 = vpack.c.b16 %v579, %v578
        %v585 = vsel %vm443, %v560, 0
        %587 = vmatprep.subr.bf16.mxu0 0
        %588 = vmatpush1.bf16.msra.mxu0 %v580
        %589 = vmatprep.subr.bf16.mxu0 0
        %590 = vmatpush1.bf16.msra.mxu0 %v581
        %591 = vmatprep.subr.bf16.mxu0 0
        %592 = vmatpush1.bf16.msra.mxu0 0
        %593 = vmatprep.subr.bf16.mxu0 0
        %594 = vmatpush1.bf16.msra.mxu0 0
        %595 = vmatprep.subr.bf16.mxu0 0
        %596 = vmatpush1.bf16.msra.mxu0 0
        %597 = vmatprep.subr.bf16.mxu0 0
        %598 = vmatpush1.bf16.msra.mxu0 0
        %599 = vmatprep.subr.bf16.mxu0 0
        %600 = vmatpush1.bf16.msra.mxu0 0
        %601 = vmatprep.subr.bf16.mxu0 0
        %602 = vmatpush1.bf16.msra.mxu0 0
        %603 = vmatprep.subr.bf16.mxu0 0
        %604 = vmatpush1.bf16.msra.mxu0 0
        %605 = vmatprep.subr.bf16.mxu0 0
        %606 = vmatpush1.bf16.msra.mxu0 0
        %607 = vmatprep.subr.bf16.mxu0 0
        %608 = vmatpush1.bf16.msra.mxu0 0
        %609 = vmatprep.subr.bf16.mxu0 0
        %610 = vmatpush1.bf16.msra.mxu0 0
        %611 = vmatprep.subr.bf16.mxu0 0
        %612 = vmatpush1.bf16.msra.mxu0 0
        %613 = vmatprep.subr.bf16.mxu0 0
        %614 = vmatpush1.bf16.msra.mxu0 0
        %615 = vmatprep.subr.bf16.mxu0 0
        %616 = vmatpush1.bf16.msra.mxu0 0
        %617 = vmatprep.subr.bf16.mxu0 0
        %618 = vmatpush1.bf16.msra.mxu0 0
        %619 = vmatprep.mubr.bf16.mxu0 0
        %620 = vmatmul.mubr.bf16.gmra.mrb[0].mxu0 %v585
        %v621 = vpop.f32.mrb[0].mxu0
        %v622 = vadd.f32 %v570, %v621
        %v623 = vpop.f32.mrb[0].mxu0
        %v624 = vpop.f32.mrb[0].mxu0
        %v625 = vadd.f32 %v570, %v624
        %v626 = vpop.f32.mrb[0].mxu0
        %627 = vdwg.mxu0
        %628 = vst [vmem:[%s341] sm:$0xff] %v622
        %629 = vst [vmem:[%s341 + $0x8] sm:$0xff] %v625
        %s630 = sand.u32 %s226, 1
        %s631 = scalar_lea.sflag [#allocation4], %s630
        %s632 = sand.u32 %s226, 1
        %s633 = smul.addr %s632, 16
        %s634 = scalar_lea.vmem [#allocation5], %s633
        // Predicated region
        $region61: #{tpu_custom_call.1} parent=55 // pred_check
          %p635 = pneg %p236
        $region62: #{tpu_custom_call.1} parent=55 // pred_check_branch
          %637 = sbr.rel (%p635) target = $region64
        $region63: #{tpu_custom_call.1} parent=55 // pred_region
          %s638 = smul.u32 2, %s24
          %s640 = ssub.s32 256, 256
          %641 = vsyncadd %s631, %s640
          %s642 = smul.addr %s638, 128
          %s643 = scalar_lea.hbm %s9, %s642
          %s644 = sshll.u32 %s634, 4
          %s645 = int_to_ptr.vmem [resolvable:$true] %s644
          %650 = dma.vmem_to_hbm [thread:$0]  %s645, 256, %s643, %s631, 128, 128, 8
        $region64: #{tpu_custom_call.1} parent=55 // pred_fallthru
          _
      $region56: #{tpu_custom_call.1} parent=5 // pred_fallthru
        _
      %p651 = scmp.le.s32.totalorder 2, %s19
      // Predicated region
      $region65: #{tpu_custom_call.1} parent=5 // pred_check
        %p652 = pneg %p651
      $region66: #{tpu_custom_call.1} parent=5 // pred_check_branch
        %654 = sbr.rel (%p652) target = $region68
      $region67: #{tpu_custom_call.1} parent=5 // pred_region
        %s655 = ssub.s32 %s19, 2
        // Predicated region
        $region69: #{tpu_custom_call.1} parent=67 // pred_check
          %p656 = pneg %p242
        $region70: #{tpu_custom_call.1} parent=67 // pred_check_branch
          %658 = sbr.rel (%p656) target = $region72
        $region71: #{tpu_custom_call.1} parent=67 // pred_region
          %s659 = sand.u32 %s227, 1
          %s660 = scalar_lea.sflag [#allocation4], %s659
          %s661 = sand.u32 %s227, 1
          %s662 = smul.addr %s661, 16
          %s663 = scalar_lea.vmem [#allocation5], %s662
          %664 = dma.done %s660, 256
        $region72: #{tpu_custom_call.1} parent=67 // pred_fallthru
          _
      $region68: #{tpu_custom_call.1} parent=5 // pred_fallthru
        _
    $region6: #{tpu_custom_call.1} parent=1 // loop_footer
      %s23 = sadd.s32 1, %s19
    $region7: #{tpu_custom_call.1} parent=1 // loop_footer_branch
      %18 = sbr.rel target = $region3
    $region8: #{tpu_custom_call.1} parent=1 // loop_exit
      _
    %665 = vsyncpa [#allocation3], 1
    %s666 = scalar_lea.sflag [#allocation3], 1
    %667 = vsyncpa %s666, 1
    %668 = vsyncpa [#allocation4], 1
    %s669 = scalar_lea.sflag [#allocation4], 1
    %670 = vsyncpa %s669, 1

// kernel: tpu_custom_call.1
$region0: #{tpu_custom_call.1}
  #allocation0 [shape = 'u32[]', space=smem, size = 0x4, offset = 0x4, fixed_abs, tag = 'smem constant byte address 0x4 - core index']
  #allocation1 [shape = 'u32[144,128]{1,0:T(1,128)}', space=vmem, size = 0x12000, scoped, tag = 'internal scratch']
  %s0 = inlined_call_operand.vmem [shape: bf16[64,16], index: 0, kind: input, shape index: {}]
  %s1 = inlined_call_operand.hbm [shape: bf16[16,32], index: 1, kind: input, shape index: {}]
  %s2 = inlined_call_operand.vmem [shape: f32[1,32], index: 2, kind: input, shape index: {}]
  %s3 = inlined_call_operand.vmem [shape: bf16[32,32], index: 3, kind: input, shape index: {}]
  %s4 = inlined_call_operand.vmem [shape: f32[1,32], index: 4, kind: input, shape index: {}]
  %s5 = inlined_call_operand.vmem [shape: bf16[32,32], index: 5, kind: input, shape index: {}]
  %s6 = inlined_call_operand.vmem [shape: f32[1,32], index: 6, kind: input, shape index: {}]
  %s7 = inlined_call_operand.vmem [shape: bf16[32,128], index: 7, kind: input, shape index: {}]
  %s8 = inlined_call_operand.vmem [shape: f32[1,128], index: 8, kind: input, shape index: {}]
  %s9 = inlined_call_operand.hbm [shape: f32[64,128], index: 9, kind: output, shape index: {}]
  %s10 = sld [smem:[#allocation0]]
  $region73: #{tpu_custom_call.1} parent=0
    _
  %s12 = ssub.s32 1, %s10
  %s13 = scalar_select 0, %s12, %s10
  $region1: #{tpu_custom_call.1} parent=0
    #allocation2 [shape = 'u8[4096]{0}', space=vmem, size = 0x1000, scoped, tag = 'input window, operand 1, single buffered']
    #allocation3 [shape = 's32[2]{0}', space=sflag, size = 0x8, scoped, tag = 'scoped memory for tpu_custom_call.1']
    #allocation4 [shape = 's32[2]{0}', space=sflag, size = 0x8, scoped, tag = 'scoped memory for tpu_custom_call.1']
    #allocation5 [shape = 'u8[16384]{0}', space=vmem, size = 0x4000, scoped, tag = 'output window, operand 0']
    %14 = vsyncpa [#allocation3], 0
    %15 = vsyncpa [#allocation4], 0
    %s16 = scalar_lea.sflag [#allocation4], 1
    %17 = vsyncpa %s16, 0
    loop: start=0, step=1, limit=6
    $region2: #{tpu_custom_call.1} parent=1 // loop_pre_header
      _
    $region3: #{tpu_custom_call.1} parent=1 // loop_header
      %s19 = sphi 0, %s23
      %p20 = scmp.ge.s32.totalorder %s19, 6
      %s29 = sphi 0, %s31
      %s32 = sphi 0, %s29
      %s33 = sphi 0, %s32
      %s49 = sphi 0, %s33
      %s53 = sphi 0, %s53
      %s55 = sphi 0, %s53
      %s56 = sphi 0, %s55
      %s70 = sphi 0, %s56
      %s74 = sphi 0, %s74
      %s76 = sphi 0, %s74
      %s77 = sphi 0, %s76
      %s91 = sphi 0, %s77
      %s95 = sphi 0, %s95
      %s97 = sphi 0, %s95
      %s98 = sphi 0, %s97
      %s112 = sphi 0, %s98
      %s116 = sphi 0, %s116
      %s118 = sphi 0, %s116
      %s119 = sphi 0, %s118
      %s133 = sphi 0, %s119
      %s137 = sphi 0, %s137
      %s139 = sphi 0, %s137
      %s140 = sphi 0, %s139
      %s154 = sphi 0, %s140
      %s158 = sphi 0, %s158
      %s160 = sphi 0, %s158
      %s161 = sphi 0, %s160
      %s175 = sphi 0, %s161
      %s179 = sphi 0, %s179
      %s181 = sphi 0, %s179
      %s182 = sphi 0, %s181
      %s196 = sphi 0, %s182
      %s200 = sphi 0, %s200
      %s202 = sphi 0, %s200
      %s203 = sphi 0, %s202
      %s217 = sphi 0, %s203
      %s223 = sphi 0, %s225
      %s226 = sphi 0, %s223
      %s227 = sphi 0, %s226
      %s243 = sphi 0, %s227
    $region4: #{tpu_custom_call.1} parent=1 // loop_header_branch
      %22 = sbr.rel (%p20) target = $region8
    $region5: #{tpu_custom_call.1} parent=1 // loop_body
      %s24 = ssub.s32 %s19, 1
      %s25 = ssub.s32 %s19, 2
      %s26 = sadd.s32 %s19, 1
      %s27 = ssub.s32 %s19, %s26
      %p28 = scmp.eq.s32.totalorder %s27, 0
      %s30 = sadd.s32 %s29, 1
      %s31 = scalar_select %p28, %s29, %s30
      %p34 = pneg %p28
      %p35 = scmp.eq.s32.totalorder %s19, 3
      %p36 = por %p34, %p35
      %p37 = scmp.ne.s32.totalorder %s29, %s32
      %p38 = scmp.eq.s32.totalorder %s19, 0
      %p39 = por %p37, %p38
      %p40 = scmp.ne.s32.totalorder %s29, %s32
      %p41 = scmp.eq.s32.totalorder %s24, 3
      %p42 = por %p40, %p41
      %p43 = scmp.ne.s32.totalorder %s32, %s33
      %p44 = scmp.eq.s32.totalorder %s24, 0
      %p45 = por %p43, %p44
      %p46 = scmp.ne.s32.totalorder %s32, %s33
      %p47 = scmp.eq.s32.totalorder %s25, 3
      %p48 = por %p46, %p47
      %p50 = scmp.ne.s32.totalorder %s33, %s49
      %p51 = scmp.eq.s32.totalorder %s25, 0
      %p52 = por %p50, %p51
      %s54 = sadd.s32 %s53, 1
      %p57 = scmp.eq.s32.totalorder %s19, 3
      %p58 = scmp.ne.s32.totalorder %s53, %s55
      %p59 = scmp.eq.s32.totalorder %s19, 0
      %p60 = por %p58, %p59
      %p61 = scmp.ne.s32.totalorder %s53, %s55
      %p62 = scmp.eq.s32.totalorder %s24, 3
      %p63 = por %p61, %p62
      %p64 = scmp.ne.s32.totalorder %s55, %s56
      %p65 = scmp.eq.s32.totalorder %s24, 0
      %p66 = por %p64, %p65
      %p67 = scmp.ne.s32.totalorder %s55, %s56
      %p68 = scmp.eq.s32.totalorder %s25, 3
      %p69 = por %p67, %p68
      %p71 = scmp.ne.s32.totalorder %s56, %s70
      %p72 = scmp.eq.s32.totalorder %s25, 0
      %p73 = por %p71, %p72
      %s75 = sadd.s32 %s74, 1
      %p78 = scmp.eq.s32.totalorder %s19, 3
      %p79 = scmp.ne.s32.totalorder %s74, %s76
      %p80 = scmp.eq.s32.totalorder %s19, 0
      %p81 = por %p79, %p80
      %p82 = scmp.ne.s32.totalorder %s74, %s76
      %p83 = scmp.eq.s32.totalorder %s24, 3
      %p84 = por %p82, %p83
      %p85 = scmp.ne.s32.totalorder %s76, %s77
      %p86 = scmp.eq.s32.totalorder %s24, 0
      %p87 = por %p85, %p86
      %p88 = scmp.ne.s32.totalorder %s76, %s77
      %p89 = scmp.eq.s32.totalorder %s25, 3
      %p90 = por %p88, %p89
      %p92 = scmp.ne.s32.totalorder %s77, %s91
      %p93 = scmp.eq.s32.totalorder %s25, 0
      %p94 = por %p92, %p93
      %s96 = sadd.s32 %s95, 1
      %p99 = scmp.eq.s32.totalorder %s19, 3
      %p100 = scmp.ne.s32.totalorder %s95, %s97
      %p101 = scmp.eq.s32.totalorder %s19, 0
      %p102 = por %p100, %p101
      %p103 = scmp.ne.s32.totalorder %s95, %s97
      %p104 = scmp.eq.s32.totalorder %s24, 3
      %p105 = por %p103, %p104
      %p106 = scmp.ne.s32.totalorder %s97, %s98
      %p107 = scmp.eq.s32.totalorder %s24, 0
      %p108 = por %p106, %p107
      %p109 = scmp.ne.s32.totalorder %s97, %s98
      %p110 = scmp.eq.s32.totalorder %s25, 3
      %p111 = por %p109, %p110
      %p113 = scmp.ne.s32.totalorder %s98, %s112
      %p114 = scmp.eq.s32.totalorder %s25, 0
      %p115 = por %p113, %p114
      %s117 = sadd.s32 %s116, 1
      %p120 = scmp.eq.s32.totalorder %s19, 3
      %p121 = scmp.ne.s32.totalorder %s116, %s118
      %p122 = scmp.eq.s32.totalorder %s19, 0
      %p123 = por %p121, %p122
      %p124 = scmp.ne.s32.totalorder %s116, %s118
      %p125 = scmp.eq.s32.totalorder %s24, 3
      %p126 = por %p124, %p125
      %p127 = scmp.ne.s32.totalorder %s118, %s119
      %p128 = scmp.eq.s32.totalorder %s24, 0
      %p129 = por %p127, %p128
      %p130 = scmp.ne.s32.totalorder %s118, %s119
      %p131 = scmp.eq.s32.totalorder %s25, 3
      %p132 = por %p130, %p131
      %p134 = scmp.ne.s32.totalorder %s119, %s133
      %p135 = scmp.eq.s32.totalorder %s25, 0
      %p136 = por %p134, %p135
      %s138 = sadd.s32 %s137, 1
      %p141 = scmp.eq.s32.totalorder %s19, 3
      %p142 = scmp.ne.s32.totalorder %s137, %s139
      %p143 = scmp.eq.s32.totalorder %s19, 0
      %p144 = por %p142, %p143
      %p145 = scmp.ne.s32.totalorder %s137, %s139
      %p146 = scmp.eq.s32.totalorder %s24, 3
      %p147 = por %p145, %p146
      %p148 = scmp.ne.s32.totalorder %s139, %s140
      %p149 = scmp.eq.s32.totalorder %s24, 0
      %p150 = por %p148, %p149
      %p151 = scmp.ne.s32.totalorder %s139, %s140
      %p152 = scmp.eq.s32.totalorder %s25, 3
      %p153 = por %p151, %p152
      %p155 = scmp.ne.s32.totalorder %s140, %s154
      %p156 = scmp.eq.s32.totalorder %s25, 0
      %p157 = por %p155, %p156
      %s159 = sadd.s32 %s158, 1
      %p162 = scmp.eq.s32.totalorder %s19, 3
      %p163 = scmp.ne.s32.totalorder %s158, %s160
      %p164 = scmp.eq.s32.totalorder %s19, 0
      %p165 = por %p163, %p164
      %p166 = scmp.ne.s32.totalorder %s158, %s160
      %p167 = scmp.eq.s32.totalorder %s24, 3
      %p168 = por %p166, %p167
      %p169 = scmp.ne.s32.totalorder %s160, %s161
      %p170 = scmp.eq.s32.totalorder %s24, 0
      %p171 = por %p169, %p170
      %p172 = scmp.ne.s32.totalorder %s160, %s161
      %p173 = scmp.eq.s32.totalorder %s25, 3
      %p174 = por %p172, %p173
      %p176 = scmp.ne.s32.totalorder %s161, %s175
      %p177 = scmp.eq.s32.totalorder %s25, 0
      %p178 = por %p176, %p177
      %s180 = sadd.s32 %s179, 1
      %p183 = scmp.eq.s32.totalorder %s19, 3
      %p184 = scmp.ne.s32.totalorder %s179, %s181
      %p185 = scmp.eq.s32.totalorder %s19, 0
      %p186 = por %p184, %p185
      %p187 = scmp.ne.s32.totalorder %s179, %s181
      %p188 = scmp.eq.s32.totalorder %s24, 3
      %p189 = por %p187, %p188
      %p190 = scmp.ne.s32.totalorder %s181, %s182
      %p191 = scmp.eq.s32.totalorder %s24, 0
      %p192 = por %p190, %p191
      %p193 = scmp.ne.s32.totalorder %s181, %s182
      %p194 = scmp.eq.s32.totalorder %s25, 3
      %p195 = por %p193, %p194
      %p197 = scmp.ne.s32.totalorder %s182, %s196
      %p198 = scmp.eq.s32.totalorder %s25, 0
      %p199 = por %p197, %p198
      %s201 = sadd.s32 %s200, 1
      %p204 = scmp.eq.s32.totalorder %s19, 3
      %p205 = scmp.ne.s32.totalorder %s200, %s202
      %p206 = scmp.eq.s32.totalorder %s19, 0
      %p207 = por %p205, %p206
      %p208 = scmp.ne.s32.totalorder %s200, %s202
      %p209 = scmp.eq.s32.totalorder %s24, 3
      %p210 = por %p208, %p209
      %p211 = scmp.ne.s32.totalorder %s202, %s203
      %p212 = scmp.eq.s32.totalorder %s24, 0
      %p213 = por %p211, %p212
      %p214 = scmp.ne.s32.totalorder %s202, %s203
      %p215 = scmp.eq.s32.totalorder %s25, 3
      %p216 = por %p214, %p215
      %p218 = scmp.ne.s32.totalorder %s203, %s217
      %p219 = scmp.eq.s32.totalorder %s25, 0
      %p220 = por %p218, %p219
      %s221 = ssub.s32 %s19, %s26
      %p222 = scmp.eq.s32.totalorder %s221, 0
      %s224 = sadd.s32 %s223, 1
      %s225 = scalar_select %p222, %s223, %s224
      %p228 = pneg %p222
      %p229 = scmp.eq.s32.totalorder %s19, 3
      %p230 = por %p228, %p229
      %p231 = scmp.ne.s32.totalorder %s223, %s226
      %p232 = scmp.eq.s32.totalorder %s19, 0
      %p233 = por %p231, %p232
      %p234 = scmp.ne.s32.totalorder %s223, %s226
      %p235 = scmp.eq.s32.totalorder %s24, 3
      %p236 = por %p234, %p235
      %p237 = scmp.ne.s32.totalorder %s226, %s227
      %p238 = scmp.eq.s32.totalorder %s24, 0
      %p239 = por %p237, %p238
      %p240 = scmp.ne.s32.totalorder %s226, %s227
      %p241 = scmp.eq.s32.totalorder %s25, 3
      %p242 = por %p240, %p241
      %p244 = scmp.ne.s32.totalorder %s227, %s243
      %p245 = scmp.eq.s32.totalorder %s25, 0
      %p246 = por %p244, %p245
      %p247 = scmp.le.s32.totalorder 1, %s19
      %p248 = scmp.lt.s32.totalorder %s19, 5
      %p249 = pnand %p247, %p248
      %p250 = pneg %p249
      // Predicated region
      $region9: #{tpu_custom_call.1} parent=5 // pred_check
        _
      $region10: #{tpu_custom_call.1} parent=5 // pred_check_branch
        %252 = sbr.rel (%p249) target = $region12
      $region11: #{tpu_custom_call.1} parent=5 // pred_region
        %s253 = ssub.s32 %s19, 1
        // Predicated region
        $region13: #{tpu_custom_call.1} parent=11 // pred_check
          %p254 = pneg %p66
        $region14: #{tpu_custom_call.1} parent=11 // pred_check_branch
          %256 = sbr.rel (%p254) target = $region16
        $region15: #{tpu_custom_call.1} parent=11 // pred_region
          %s258 = ssub.s32 128, 128
          %259 = vsyncadd [#allocation3], %s258
          %s260 = sshll.u32 [#allocation2], 4
          %s261 = int_to_ptr.vmem [resolvable:$true] %s260
          %266 = dma.hbm_to_vmem [thread:$0]  %s1, 128, %s261, [#allocation3], 64, 64, 4
        $region16: #{tpu_custom_call.1} parent=11 // pred_fallthru
          _
        // Predicated region
        $region17: #{tpu_custom_call.1} parent=11 // pred_check
          %p267 = pneg %p87
        $region18: #{tpu_custom_call.1} parent=11 // pred_check_branch
          %269 = sbr.rel (%p267) target = $region20
        $region19: #{tpu_custom_call.1} parent=11 // pred_region
          _
        $region20: #{tpu_custom_call.1} parent=11 // pred_fallthru
          _
        // Predicated region
        $region21: #{tpu_custom_call.1} parent=11 // pred_check
          %p270 = pneg %p108
        $region22: #{tpu_custom_call.1} parent=11 // pred_check_branch
          %272 = sbr.rel (%p270) target = $region24
        $region23: #{tpu_custom_call.1} parent=11 // pred_region
          _
        $region24: #{tpu_custom_call.1} parent=11 // pred_fallthru
          _
        // Predicated region
        $region25: #{tpu_custom_call.1} parent=11 // pred_check
          %p273 = pneg %p129
        $region26: #{tpu_custom_call.1} parent=11 // pred_check_branch
          %275 = sbr.rel (%p273) target = $region28
        $region27: #{tpu_custom_call.1} parent=11 // pred_region
          _
        $region28: #{tpu_custom_call.1} parent=11 // pred_fallthru
          _
        // Predicated region
        $region29: #{tpu_custom_call.1} parent=11 // pred_check
          %p276 = pneg %p150
        $region30: #{tpu_custom_call.1} parent=11 // pred_check_branch
          %278 = sbr.rel (%p276) target = $region32
        $region31: #{tpu_custom_call.1} parent=11 // pred_region
          _
        $region32: #{tpu_custom_call.1} parent=11 // pred_fallthru
          _
        // Predicated region
        $region33: #{tpu_custom_call.1} parent=11 // pred_check
          %p279 = pneg %p171
        $region34: #{tpu_custom_call.1} parent=11 // pred_check_branch
          %281 = sbr.rel (%p279) target = $region36
        $region35: #{tpu_custom_call.1} parent=11 // pred_region
          _
        $region36: #{tpu_custom_call.1} parent=11 // pred_fallthru
          _
        // Predicated region
        $region37: #{tpu_custom_call.1} parent=11 // pred_check
          %p282 = pneg %p192
        $region38: #{tpu_custom_call.1} parent=11 // pred_check_branch
          %284 = sbr.rel (%p282) target = $region40
        $region39: #{tpu_custom_call.1} parent=11 // pred_region
          _
        $region40: #{tpu_custom_call.1} parent=11 // pred_fallthru
          _
        // Predicated region
        $region41: #{tpu_custom_call.1} parent=11 // pred_check
          %p285 = pneg %p213
        $region42: #{tpu_custom_call.1} parent=11 // pred_check_branch
          %287 = sbr.rel (%p285) target = $region44
        $region43: #{tpu_custom_call.1} parent=11 // pred_region
          _
        $region44: #{tpu_custom_call.1} parent=11 // pred_fallthru
          _
      $region12: #{tpu_custom_call.1} parent=5 // pred_fallthru
        _
      %p288 = scmp.lt.s32.totalorder %s19, 4
      // Predicated region
      $region45: #{tpu_custom_call.1} parent=5 // pred_check
        %p289 = pneg %p288
      $region46: #{tpu_custom_call.1} parent=5 // pred_check_branch
        %291 = sbr.rel (%p289) target = $region48
      $region47: #{tpu_custom_call.1} parent=5 // pred_region
        // Predicated region
        $region49: #{tpu_custom_call.1} parent=47 // pred_check
          %p292 = pneg %p39
        $region50: #{tpu_custom_call.1} parent=47 // pred_check_branch
          %294 = sbr.rel (%p292) target = $region52
        $region51: #{tpu_custom_call.1} parent=47 // pred_region
          %s295 = smul.u32 2, %s19
          %p296 = scmp.lt.s32.totalorder %s295, 7
          %s297 = scalar_select %p296, %s295, 7
          %s298 = smul.addr %s297, 4
          %s299 = scalar_lea.vmem %s0, %s298
          %s300 = smul.u32 2, %s19
        $region52: #{tpu_custom_call.1} parent=47 // pred_fallthru
          _
      $region48: #{tpu_custom_call.1} parent=5 // pred_fallthru
        _
      %p301 = scmp.le.s32.totalorder 1, %s19
      %p302 = scmp.lt.s32.totalorder %s19, 5
      %p303 = pnand %p301, %p302
      %p304 = pneg %p303
      // Predicated region
      $region53: #{tpu_custom_call.1} parent=5 // pred_check
        _
      $region54: #{tpu_custom_call.1} parent=5 // pred_check_branch
        %306 = sbr.rel (%p303) target = $region56
      $region55: #{tpu_custom_call.1} parent=5 // pred_region
        %s307 = ssub.s32 %s19, 1
        // Predicated region
        $region57: #{tpu_custom_call.1} parent=55 // pred_check
          %p308 = pneg %p66
        $region58: #{tpu_custom_call.1} parent=55 // pred_check_branch
          %310 = sbr.rel (%p308) target = $region60
        $region59: #{tpu_custom_call.1} parent=55 // pred_region
          %311 = dma.done [#allocation3], 128
        $region60: #{tpu_custom_call.1} parent=55 // pred_fallthru
          _
        %s312 = smul.u32 2, %s24
        %p313 = scmp.lt.s32.totalorder %s312, 7
        %s314 = scalar_select %p313, %s312, 7
        %s315 = smul.addr %s314, 4
        %s316 = scalar_lea.vmem %s0, %s315
        %p317 = pneg %p45
        %p318 = pneg %p42
        %p319 = pneg %p66
        %p320 = pneg %p63
        %p321 = pneg %p87
        %p322 = pneg %p84
        %p323 = pneg %p108
        %p324 = pneg %p105
        %p325 = pneg %p129
        %p326 = pneg %p126
        %p327 = pneg %p150
        %p328 = pneg %p147
        %p329 = pneg %p171
        %p330 = pneg %p168
        %p331 = pneg %p192
        %p332 = pneg %p189
        %p333 = pneg %p213
        %p334 = pneg %p210
        %p335 = pneg %p239
        %p336 = pneg %p236
        %s337 = sand.u32 %s226, 1
        %s338 = scalar_lea.sflag [#allocation4], %s337
        %s339 = sand.u32 %s226, 1
        %s340 = smul.addr %s339, 16
        %s341 = scalar_lea.vmem [#allocation5], %s340
        %s342 = smul.u32 2, %s24
        %p343 = scmp.lt.s32.totalorder %s342, 7
        %s344 = scalar_select %p343, %s342, 7
        %s345 = smul.addr %s344, 4
        %s346 = scalar_lea.vmem %s0, %s345
        %s347 = smul.u32 2, %s24
        %s348 = smul.u32 2, %s24
        %v350 = vld [vmem:[%s346] sm:$0xf]
        %v351 = vld [vmem:[%s346 + $0x4] sm:$0xf]
        %v352 = vld [vmem:[#allocation2] sm:$0xf]
        %v353 = vld [vmem:[#allocation2 + $0x4] sm:$0xf]
        %v354 = vld [vmem:[%s2] sm:$0x1]
        %v356 = vlaneseq
        %v357 = vshrl.u32 %v356, 7
        %v358 = vsub.s32 0, %v357
        %v359 = vrot.slane %v354, %v358
        %v363 = vunpack.c.l.b16 %v350
        %v364 = vunpack.c.l.b16 %v351
        %v365 = vpack.c.b16 %v364, %v363
        %v368 = vunpack.c.l.b16 %v352
        %v369 = vunpack.c.l.b16 %v353
        %v370 = vpack.c.b16 %v369, %v368
        %vm372 = vcmask 130048
        %v374 = vsel %vm372, %v365, 0
        %376 = vmatprep.subr.bf16.mxu0 0
        %377 = vmatpush1.bf16.msra.mxu0 %v370
        %378 = vmatprep.subr.bf16.mxu0 0
        %379 = vmatpush1.bf16.msra.mxu0 0
        %380 = vmatprep.subr.bf16.mxu0 0
        %381 = vmatpush1.bf16.msra.mxu0 0
        %382 = vmatprep.subr.bf16.mxu0 0
        %383 = vmatpush1.bf16.msra.mxu0 0
        %384 = vmatprep.subr.bf16.mxu0 0
        %385 = vmatpush1.bf16.msra.mxu0 0
        %386 = vmatprep.subr.bf16.mxu0 0
        %387 = vmatpush1.bf16.msra.mxu0 0
        %388 = vmatprep.subr.bf16.mxu0 0
        %389 = vmatpush1.bf16.msra.mxu0 0
        %390 = vmatprep.subr.bf16.mxu0 0
        %391 = vmatpush1.bf16.msra.mxu0 0
        %392 = vmatprep.subr.bf16.mxu0 0
        %393 = vmatpush1.bf16.msra.mxu0 0
        %394 = vmatprep.subr.bf16.mxu0 0
        %395 = vmatpush1.bf16.msra.mxu0 0
        %396 = vmatprep.subr.bf16.mxu0 0
        %397 = vmatpush1.bf16.msra.mxu0 0
        %398 = vmatprep.subr.bf16.mxu0 0
        %399 = vmatpush1.bf16.msra.mxu0 0
        %400 = vmatprep.subr.bf16.mxu0 0
        %401 = vmatpush1.bf16.msra.mxu0 0
        %402 = vmatprep.subr.bf16.mxu0 0
        %403 = vmatpush1.bf16.msra.mxu0 0
        %404 = vmatprep.subr.bf16.mxu0 0
        %405 = vmatpush1.bf16.msra.mxu0 0
        %406 = vmatprep.subr.bf16.mxu0 0
        %407 = vmatpush1.bf16.msra.mxu0 0
        %408 = vmatprep.mubr.bf16.mxu0 0
        %409 = vmatmul.mubr.bf16.gmra.mrb[0].mxu0 %v374
        %v410 = vpop.f32.mrb[0].mxu0
        %v411 = vadd.f32 %v359, %v410
        %v412 = vpop.f32.mrb[0].mxu0
        %v413 = vpop.f32.mrb[0].mxu0
        %v414 = vadd.f32 %v359, %v413
        %v415 = vpop.f32.mrb[0].mxu0
        %416 = vdwg.mxu0
        %v417 = vmax.f32 %v411, 0.0
        %v418 = vmax.f32 %v414, 0.0
        %v419 = vpack.c.bf16 %v418, %v417
        %v420 = vld [vmem:[%s3] sm:$0xf]
        %v421 = vld [vmem:[%s3 + $0x4] sm:$0xf]
        %v422 = vld [vmem:[%s3 + $0x8] sm:$0xf]
        %v423 = vld [vmem:[%s3 + $0xc] sm:$0xf]
        %v424 = vld [vmem:[%s4] sm:$0x1]
        %v426 = vlaneseq
        %v427 = vshrl.u32 %v426, 7
        %v428 = vsub.s32 0, %v427
        %v429 = vrot.slane %v424, %v428
        %v435 = vunpack.c.l.b16 %v420
        %v436 = vunpack.c.l.b16 %v421
        %v437 = vunpack.c.l.b16 %v422
        %v438 = vunpack.c.l.b16 %v423
        %v439 = vpack.c.b16 %v436, %v435
        %v440 = vpack.c.b16 %v438, %v437
        %vm443 = vcmask 261120
        %v445 = vsel %vm443, %v419, 0
        %447 = vmatprep.subr.bf16.mxu0 0
        %448 = vmatpush1.bf16.msra.mxu0 %v439
        %449 = vmatprep.subr.bf16.mxu0 0
        %450 = vmatpush1.bf16.msra.mxu0 %v440
        %451 = vmatprep.subr.bf16.mxu0 0
        %452 = vmatpush1.bf16.msra.mxu0 0
        %453 = vmatprep.subr.bf16.mxu0 0
        %454 = vmatpush1.bf16.msra.mxu0 0
        %455 = vmatprep.subr.bf16.mxu0 0
        %456 = vmatpush1.bf16.msra.mxu0 0
        %457 = vmatprep.subr.bf16.mxu0 0
        %458 = vmatpush1.bf16.msra.mxu0 0
        %459 = vmatprep.subr.bf16.mxu0 0
        %460 = vmatpush1.bf16.msra.mxu0 0
        %461 = vmatprep.subr.bf16.mxu0 0
        %462 = vmatpush1.bf16.msra.mxu0 0
        %463 = vmatprep.subr.bf16.mxu0 0
        %464 = vmatpush1.bf16.msra.mxu0 0
        %465 = vmatprep.subr.bf16.mxu0 0
        %466 = vmatpush1.bf16.msra.mxu0 0
        %467 = vmatprep.subr.bf16.mxu0 0
        %468 = vmatpush1.bf16.msra.mxu0 0
        %469 = vmatprep.subr.bf16.mxu0 0
        %470 = vmatpush1.bf16.msra.mxu0 0
        %471 = vmatprep.subr.bf16.mxu0 0
        %472 = vmatpush1.bf16.msra.mxu0 0
        %473 = vmatprep.subr.bf16.mxu0 0
        %474 = vmatpush1.bf16.msra.mxu0 0
        %475 = vmatprep.subr.bf16.mxu0 0
        %476 = vmatpush1.bf16.msra.mxu0 0
        %477 = vmatprep.subr.bf16.mxu0 0
        %478 = vmatpush1.bf16.msra.mxu0 0
        %479 = vmatprep.mubr.bf16.mxu0 0
        %480 = vmatmul.mubr.bf16.gmra.mrb[0].mxu0 %v445
        %v481 = vpop.f32.mrb[0].mxu0
        %v482 = vadd.f32 %v429, %v481
        %v483 = vpop.f32.mrb[0].mxu0
        %v484 = vpop.f32.mrb[0].mxu0
        %v485 = vadd.f32 %v429, %v484
        %v486 = vpop.f32.mrb[0].mxu0
        %487 = vdwg.mxu0
        %v488 = vmax.f32 %v482, 0.0
        %v489 = vmax.f32 %v485, 0.0
        %v490 = vpack.c.bf16 %v489, %v488
        %v491 = vld [vmem:[%s5] sm:$0xf]
        %v492 = vld [vmem:[%s5 + $0x4] sm:$0xf]
        %v493 = vld [vmem:[%s5 + $0x8] sm:$0xf]
        %v494 = vld [vmem:[%s5 + $0xc] sm:$0xf]
        %v495 = vld [vmem:[%s6] sm:$0x1]
        %v497 = vlaneseq
        %v498 = vshrl.u32 %v497, 7
        %v499 = vsub.s32 0, %v498
        %v500 = vrot.slane %v495, %v499
        %v506 = vunpack.c.l.b16 %v491
        %v507 = vunpack.c.l.b16 %v492
        %v508 = vunpack.c.l.b16 %v493
        %v509 = vunpack.c.l.b16 %v494
        %v510 = vpack.c.b16 %v507, %v506
        %v511 = vpack.c.b16 %v509, %v508
        %v515 = vsel %vm443, %v490, 0
        %517 = vmatprep.subr.bf16.mxu0 0
        %518 = vmatpush1.bf16.msra.mxu0 %v510
        %519 = vmatprep.subr.bf16.mxu0 0
        %520 = vmatpush1.bf16.msra.mxu0 %v511
        %521 = vmatprep.subr.bf16.mxu0 0
        %522 = vmatpush1.bf16.msra.mxu0 0
        %523 = vmatprep.subr.bf16.mxu0 0
        %524 = vmatpush1.bf16.msra.mxu0 0
        %525 = vmatprep.subr.bf16.mxu0 0
        %526 = vmatpush1.bf16.msra.mxu0 0
        %527 = vmatprep.subr.bf16.mxu0 0
        %528 = vmatpush1.bf16.msra.mxu0 0
        %529 = vmatprep.subr.bf16.mxu0 0
        %530 = vmatpush1.bf16.msra.mxu0 0
        %531 = vmatprep.subr.bf16.mxu0 0
        %532 = vmatpush1.bf16.msra.mxu0 0
        %533 = vmatprep.subr.bf16.mxu0 0
        %534 = vmatpush1.bf16.msra.mxu0 0
        %535 = vmatprep.subr.bf16.mxu0 0
        %536 = vmatpush1.bf16.msra.mxu0 0
        %537 = vmatprep.subr.bf16.mxu0 0
        %538 = vmatpush1.bf16.msra.mxu0 0
        %539 = vmatprep.subr.bf16.mxu0 0
        %540 = vmatpush1.bf16.msra.mxu0 0
        %541 = vmatprep.subr.bf16.mxu0 0
        %542 = vmatpush1.bf16.msra.mxu0 0
        %543 = vmatprep.subr.bf16.mxu0 0
        %544 = vmatpush1.bf16.msra.mxu0 0
        %545 = vmatprep.subr.bf16.mxu0 0
        %546 = vmatpush1.bf16.msra.mxu0 0
        %547 = vmatprep.subr.bf16.mxu0 0
        %548 = vmatpush1.bf16.msra.mxu0 0
        %549 = vmatprep.mubr.bf16.mxu0 0
        %550 = vmatmul.mubr.bf16.gmra.mrb[0].mxu0 %v515
        %v551 = vpop.f32.mrb[0].mxu0
        %v552 = vadd.f32 %v500, %v551
        %v553 = vpop.f32.mrb[0].mxu0
        %v554 = vpop.f32.mrb[0].mxu0
        %v555 = vadd.f32 %v500, %v554
        %v556 = vpop.f32.mrb[0].mxu0
        %557 = vdwg.mxu0
        %v558 = vmax.f32 %v552, 0.0
        %v559 = vmax.f32 %v555, 0.0
        %v560 = vpack.c.bf16 %v559, %v558
        %v561 = vld [vmem:[%s7] sm:$0xf]
        %v562 = vld [vmem:[%s7 + $0x4] sm:$0xf]
        %v563 = vld [vmem:[%s7 + $0x8] sm:$0xf]
        %v564 = vld [vmem:[%s7 + $0xc] sm:$0xf]
        %v565 = vld [vmem:[%s8] sm:$0x1]
        %v567 = vlaneseq
        %v568 = vshrl.u32 %v567, 7
        %v569 = vsub.s32 0, %v568
        %v570 = vrot.slane %v565, %v569
        %v576 = vunpack.c.l.b16 %v561
        %v577 = vunpack.c.l.b16 %v562
        %v578 = vunpack.c.l.b16 %v563
        %v579 = vunpack.c.l.b16 %v564
        %v580 = vpack.c.b16 %v577, %v576
        %v581 = vpack.c.b16 %v579, %v578
        %v585 = vsel %vm443, %v560, 0
        %587 = vmatprep.subr.bf16.mxu0 0
        %588 = vmatpush1.bf16.msra.mxu0 %v580
        %589 = vmatprep.subr.bf16.mxu0 0
        %590 = vmatpush1.bf16.msra.mxu0 %v581
        %591 = vmatprep.subr.bf16.mxu0 0
        %592 = vmatpush1.bf16.msra.mxu0 0
        %593 = vmatprep.subr.bf16.mxu0 0
        %594 = vmatpush1.bf16.msra.mxu0 0
        %595 = vmatprep.subr.bf16.mxu0 0
        %596 = vmatpush1.bf16.msra.mxu0 0
        %597 = vmatprep.subr.bf16.mxu0 0
        %598 = vmatpush1.bf16.msra.mxu0 0
        %599 = vmatprep.subr.bf16.mxu0 0
        %600 = vmatpush1.bf16.msra.mxu0 0
        %601 = vmatprep.subr.bf16.mxu0 0
        %602 = vmatpush1.bf16.msra.mxu0 0
        %603 = vmatprep.subr.bf16.mxu0 0
        %604 = vmatpush1.bf16.msra.mxu0 0
        %605 = vmatprep.subr.bf16.mxu0 0
        %606 = vmatpush1.bf16.msra.mxu0 0
        %607 = vmatprep.subr.bf16.mxu0 0
        %608 = vmatpush1.bf16.msra.mxu0 0
        %609 = vmatprep.subr.bf16.mxu0 0
        %610 = vmatpush1.bf16.msra.mxu0 0
        %611 = vmatprep.subr.bf16.mxu0 0
        %612 = vmatpush1.bf16.msra.mxu0 0
        %613 = vmatprep.subr.bf16.mxu0 0
        %614 = vmatpush1.bf16.msra.mxu0 0
        %615 = vmatprep.subr.bf16.mxu0 0
        %616 = vmatpush1.bf16.msra.mxu0 0
        %617 = vmatprep.subr.bf16.mxu0 0
        %618 = vmatpush1.bf16.msra.mxu0 0
        %619 = vmatprep.mubr.bf16.mxu0 0
        %620 = vmatmul.mubr.bf16.gmra.mrb[0].mxu0 %v585
        %v621 = vpop.f32.mrb[0].mxu0
        %v622 = vadd.f32 %v570, %v621
        %v623 = vpop.f32.mrb[0].mxu0
        %v624 = vpop.f32.mrb[0].mxu0
        %v625 = vadd.f32 %v570, %v624
        %v626 = vpop.f32.mrb[0].mxu0
        %627 = vdwg.mxu0
        %628 = vst [vmem:[%s341] sm:$0xff] %v622
        %629 = vst [vmem:[%s341 + $0x8] sm:$0xff] %v625
        %s630 = sand.u32 %s226, 1
        %s631 = scalar_lea.sflag [#allocation4], %s630
        %s632 = sand.u32 %s226, 1
        %s633 = smul.addr %s632, 16
        %s634 = scalar_lea.vmem [#allocation5], %s633
        // Predicated region
        $region61: #{tpu_custom_call.1} parent=55 // pred_check
          %p635 = pneg %p236
        $region62: #{tpu_custom_call.1} parent=55 // pred_check_branch
          %637 = sbr.rel (%p635) target = $region64
        $region63: #{tpu_custom_call.1} parent=55 // pred_region
          %s638 = smul.u32 2, %s24
          %s640 = ssub.s32 256, 256
          %641 = vsyncadd %s631, %s640
          %s642 = smul.addr %s638, 128
          %s643 = scalar_lea.hbm %s9, %s642
          %s644 = sshll.u32 %s634, 4
          %s645 = int_to_ptr.vmem [resolvable:$true] %s644
          %650 = dma.vmem_to_hbm [thread:$0]  %s645, 256, %s643, %s631, 128, 128, 8
        $region64: #{tpu_custom_call.1} parent=55 // pred_fallthru
          _
      $region56: #{tpu_custom_call.1} parent=5 // pred_fallthru
        _
      %p651 = scmp.le.s32.totalorder 2, %s19
      // Predicated region
      $region65: #{tpu_custom_call.1} parent=5 // pred_check
        %p652 = pneg %p651
      $region66: #{tpu_custom_call.1} parent=5 // pred_check_branch
        %654 = sbr.rel (%p652) target = $region68
      $region67: #{tpu_custom_call.1} parent=5 // pred_region
        %s655 = ssub.s32 %s19, 2
        // Predicated region
        $region69: #{tpu_custom_call.1} parent=67 // pred_check
          %p656 = pneg %p242
        $region70: #{tpu_custom_call.1} parent=67 // pred_check_branch
          %658 = sbr.rel (%p656) target = $region72
        $region71: #{tpu_custom_call.1} parent=67 // pred_region
          %s659 = sand.u32 %s227, 1
          %s660 = scalar_lea.sflag [#allocation4], %s659
          %s661 = sand.u32 %s227, 1
          %s662 = smul.addr %s661, 16
          %s663 = scalar_lea.vmem [#allocation5], %s662
          %664 = dma.done %s660, 256
        $region72: #{tpu_custom_call.1} parent=67 // pred_fallthru
          _
      $region68: #{tpu_custom_call.1} parent=5 // pred_fallthru
        _
    $region6: #{tpu_custom_call.1} parent=1 // loop_footer
      %s23 = sadd.s32 1, %s19
    $region7: #{tpu_custom_call.1} parent=1 // loop_footer_branch
      %18 = sbr.rel target = $region3
    $region8: #{tpu_custom_call.1} parent=1 // loop_exit
      _
    %665 = vsyncpa [#allocation3], 1
    %s666 = scalar_lea.sflag [#allocation3], 1
    %667 = vsyncpa %s666, 1
    %668 = vsyncpa [#allocation4], 1
    %s669 = scalar_lea.sflag [#allocation4], 1
    %670 = vsyncpa %s669, 1

</llo_original>
